<compile_context>
chip_gen: v5e
topology: v5e:2x2
jax: 0.10.0
libtpu: 0.0.40
codegen_flags: <defaults>
</compile_context>

<pallas_src>
import functools

import jax
import jax.numpy as jnp
from jax import lax
from jax.experimental import pallas as pl
from jax.experimental.pallas import tpu as pltpu


def _pick_tile(n: int, target: int) -> int:
    """Largest divisor of n that is a multiple of 8 and <= target (else n)."""
    if n <= target:
        return n
    t = target - (target % 8)
    while t >= 8:
        if n % t == 0:
            return t
        t -= 8
    return n  # fall back to the full extent (still satisfies (8,128) rule)


def _pam_flash_kernel(xq_ref, xkv_ref, wq_ref, bq_ref, wkv_ref, bkv_ref,
                      o_ref, q_sc, m_sc, l_sc, acc_sc, *, channels):
    ki = pl.program_id(2)
    nk = pl.num_programs(2)

    # --- init (first kv step): project Q for this query tile, reset stats ---
    @pl.when(ki == 0)
    def _init():
        xq = xq_ref[0].astype(jnp.bfloat16)                       # (TQ, C)
        q = jnp.dot(xq, wq_ref[...],
                    preferred_element_type=jnp.float32) + bq_ref[...]
        q_sc[...] = q.astype(jnp.bfloat16)
        m_sc[...] = jnp.full(m_sc.shape, -jnp.inf, dtype=m_sc.dtype)
        l_sc[...] = jnp.zeros(l_sc.shape, dtype=l_sc.dtype)
        acc_sc[...] = jnp.zeros(acc_sc.shape, dtype=acc_sc.dtype)

    # --- fused K/V projection for the current key/value tile ---
    xkv = xkv_ref[0].astype(jnp.bfloat16)                          # (TK, C)
    kv = jnp.dot(xkv, wkv_ref[...],
                 preferred_element_type=jnp.float32) + bkv_ref[...]  # (TK, 2C)
    k = kv[:, :channels].astype(jnp.bfloat16)                      # (TK, C)
    v = kv[:, channels:].astype(jnp.bfloat16)                      # (TK, C)

    # --- energy tile (TQ, TK): contract over channels, no transpose of K ---
    s = lax.dot_general(q_sc[...], k,
                        dimension_numbers=(((1,), (1,)), ((), ())),
                        preferred_element_type=jnp.float32)

    # --- online softmax update (f32 statistics) ---
    m_prev = m_sc[...]
    m_new = jnp.maximum(m_prev, jnp.max(s, axis=-1, keepdims=True))
    alpha = jnp.exp(m_prev - m_new)
    p = jnp.exp(s - m_new)
    l_sc[...] = alpha * l_sc[...] + jnp.sum(p, axis=-1, keepdims=True)
    acc_sc[...] = alpha * acc_sc[...] + jnp.dot(
        p.astype(jnp.bfloat16), v, preferred_element_type=jnp.float32)
    m_sc[...] = m_new

    # --- finalize (last kv step): normalize, add residual, store ---
    @pl.when(ki == nk - 1)
    def _finalize():
        inv_l = pl.reciprocal(l_sc[...], approx=True)
        out = acc_sc[...] * inv_l + xq_ref[0].astype(jnp.float32)
        o_ref[0] = out.astype(o_ref.dtype)


def position_am_forward(x_nchw, wq, bq, wk, bk, wv, bv, *, tq=256, tk=256):
    """x_nchw: (B, C, H, W) float32. Weights: (C, C) [out,in]; biases: (C,)."""
    B, C, H, W = x_nchw.shape
    N = H * W

    # NCHW -> (B, N, C)  (pixels-major; lane axis = channels)
    x_nc = jnp.transpose(x_nchw, (0, 2, 3, 1)).reshape(B, N, C)

    tq = _pick_tile(N, tq)
    tk = _pick_tile(N, tk)

    # Pre-transposed bf16 weights; K/V fused into one (C, 2C) matrix.
    wq_t = wq.T.astype(jnp.bfloat16)                               # (C, C)
    wkv_t = jnp.concatenate([wk.T, wv.T], axis=1).astype(jnp.bfloat16)  # (C, 2C)
    bq2 = bq.reshape(1, C).astype(jnp.float32)
    bkv2 = jnp.concatenate([bk, bv]).reshape(1, 2 * C).astype(jnp.float32)

    kernel = functools.partial(_pam_flash_kernel, channels=C)

    out_nc = pl.pallas_call(
        kernel,
        out_shape=jax.ShapeDtypeStruct((B, N, C), x_nchw.dtype),
        grid_spec=pltpu.PrefetchScalarGridSpec(
            num_scalar_prefetch=0,
            grid=(B, N // tq, N // tk),
            in_specs=[
                pl.BlockSpec((1, tq, C), lambda b, qi, ki: (b, qi, 0)),  # x (query tile)
                pl.BlockSpec((1, tk, C), lambda b, qi, ki: (b, ki, 0)),  # x (kv tile)
                pl.BlockSpec((C, C), lambda b, qi, ki: (0, 0)),          # Wq^T
                pl.BlockSpec((1, C), lambda b, qi, ki: (0, 0)),          # bq
                pl.BlockSpec((C, 2 * C), lambda b, qi, ki: (0, 0)),      # [Wk^T | Wv^T]
                pl.BlockSpec((1, 2 * C), lambda b, qi, ki: (0, 0)),      # [bk | bv]
            ],
            out_specs=pl.BlockSpec((1, tq, C), lambda b, qi, ki: (b, qi, 0)),
            scratch_shapes=[
                pltpu.VMEM((tq, C), jnp.bfloat16),   # Q tile (reused across kv)
                pltpu.VMEM((tq, 1), jnp.float32),    # running max m
                pltpu.VMEM((tq, 1), jnp.float32),    # running sum l
                pltpu.VMEM((tq, C), jnp.float32),    # output accumulator
            ],
        ),
        compiler_params=pltpu.CompilerParams(
            dimension_semantics=("parallel", "parallel", "arbitrary"),
            vmem_limit_bytes=32 * 1024 * 1024,
        ),
    )(x_nc, x_nc, wq_t, bq2, wkv_t, bkv2)

    # (B, N, C) -> NCHW
    return jnp.transpose(out_nc.reshape(B, H, W, C), (0, 3, 1, 2))


def _reference(x_nchw, wq, bq, wk, bk, wv, bv):
    """Pure-JAX f32 reference mirroring the PyTorch forward."""
    B, C, H, W = x_nchw.shape
    N = H * W
    hp = lax.Precision.HIGHEST
    x_nc = jnp.transpose(x_nchw, (0, 2, 3, 1)).reshape(B, N, C)
    q = jnp.einsum('bnc,oc->bno', x_nc, wq, precision=hp) + bq
    k = jnp.einsum('bnc,oc->bno', x_nc, wk, precision=hp) + bk
    v = jnp.einsum('bnc,oc->bno', x_nc, wv, precision=hp) + bv
    energy = jnp.einsum('bnc,bmc->bnm', q, k, precision=hp)     # (B, N, N)
    attn = jax.nn.softmax(energy, axis=-1)
    out = jnp.einsum('bnm,bmc->bnc', attn, v, precision=hp) + x_nc
    return jnp.transpose(out.reshape(B, H, W, C), (0, 3, 1, 2))


if __name__ == "__main__":
    B, C, H, W = 2, 32, 16, 16   # N = H*W = 256 -> exercises 2x2 q/kv tiling below

    key = jax.random.PRNGKey(0)
    k_x, k_wq, k_bq, k_wk, k_bk, k_wv, k_bv = jax.random.split(key, 7)

    x = jax.random.normal(k_x, (B, C, H, W), dtype=jnp.float32)

    # Deterministic parameter init (shapes from nn.Conv2d(in_dim, in_dim, 1)).
    scale = 1.0 / jnp.sqrt(jnp.float32(C))
    wq = jax.random.uniform(k_wq, (C, C), jnp.float32, -scale, scale)
    bq = jax.random.uniform(k_bq, (C,), jnp.float32, -scale, scale)
    wk = jax.random.uniform(k_wk, (C, C), jnp.float32, -scale, scale)
    bk = jax.random.uniform(k_bk, (C,), jnp.float32, -scale, scale)
    wv = jax.random.uniform(k_wv, (C, C), jnp.float32, -scale, scale)
    bv = jax.random.uniform(k_bv, (C,), jnp.float32, -scale, scale)
    # gamma = 0.0  # declared in the PyTorch __init__ but unused by forward

    # tq=tk=128 so N=256 exercises the multi-tile online-softmax path.
    out = position_am_forward(x, wq, bq, wk, bk, wv, bv, tq=128, tk=128)
    out = jax.block_until_ready(out)

    ref = _reference(x, wq, bq, wk, bk, wv, bv)
    assert out.shape == (B, C, H, W)
    # bf16 MXU operands (f32 accumulation) -> tolerance loosened vs pure f32.
    assert jnp.allclose(out, ref, atol=1e-1, rtol=1e-2), (
        "mismatch vs reference: max |err| = "
        f"{float(jnp.max(jnp.abs(out - ref)))}")

    print("KERNEL_OK")
</pallas_src>

<mosaic_0001>
module attributes {stable_mosaic.version = 11 : i64} {
  func.func @_pam_flash_kernel(%arg0: i32, %arg1: i32, %arg2: i32, %arg3: memref<1x128x32xf32, #tpu.memory_space<vmem>>, %arg4: memref<1x128x32xf32, #tpu.memory_space<vmem>>, %arg5: memref<32x32xbf16, #tpu.memory_space<vmem>>, %arg6: memref<1x32xf32, #tpu.memory_space<vmem>>, %arg7: memref<32x64xbf16, #tpu.memory_space<vmem>>, %arg8: memref<1x64xf32, #tpu.memory_space<vmem>>, %arg9: memref<1x128x32xf32, #tpu.memory_space<vmem>>, %arg10: memref<128x32xbf16, #tpu.memory_space<vmem>>, %arg11: memref<128x1xf32, #tpu.memory_space<vmem>>, %arg12: memref<128x1xf32, #tpu.memory_space<vmem>>, %arg13: memref<128x32xf32, #tpu.memory_space<vmem>>) attributes {dimension_semantics = [#tpu.dimension_semantics<parallel>, #tpu.dimension_semantics<parallel>, #tpu.dimension_semantics<arbitrary>], iteration_bounds = array<i64: 2, 2, 2>, scalar_prefetch = 0 : i64, scratch_operands = 4 : i64, tpu.core_type = #tpu.core_type<tc>, window_params = [{transform_indices = @transform_0, window_bounds = array<i64: 1, 128, 32>}, {transform_indices = @transform_1, window_bounds = array<i64: 1, 128, 32>}, {pipeline_mode = #tpu.pipeline_mode<synchronous>, transform_indices = @transform_2, window_bounds = array<i64: 32, 32>}, {pipeline_mode = #tpu.pipeline_mode<synchronous>, transform_indices = @transform_3, window_bounds = array<i64: 1, 32>}, {pipeline_mode = #tpu.pipeline_mode<synchronous>, transform_indices = @transform_4, window_bounds = array<i64: 32, 64>}, {pipeline_mode = #tpu.pipeline_mode<synchronous>, transform_indices = @transform_5, window_bounds = array<i64: 1, 64>}, {transform_indices = @transform_6, window_bounds = array<i64: 1, 128, 32>}]} {
    %c0_i32 = arith.constant 0 : i32
    %0 = arith.cmpi eq, %arg2, %c0_i32 : i32
    %1 = arith.extui %0 : i1 to i32
    %c0_i32_0 = arith.constant 0 : i32
    %2 = arith.cmpi ne, %1, %c0_i32_0 : i32
    scf.if %2 {
      %c0_26 = arith.constant 0 : index
      %c0_27 = arith.constant 0 : index
      %c0_28 = arith.constant 0 : index
      %43 = vector.load %arg3[%c0_26, %c0_27, %c0_28] : memref<1x128x32xf32, #tpu.memory_space<vmem>>, vector<1x128x32xf32>
      %44 = vector.shape_cast %43 : vector<1x128x32xf32> to vector<128x32xf32>
      %45 = arith.truncf %44 : vector<128x32xf32> to vector<128x32xbf16>
      %c0_29 = arith.constant 0 : index
      %c0_30 = arith.constant 0 : index
      %46 = vector.load %arg5[%c0_29, %c0_30] : memref<32x32xbf16, #tpu.memory_space<vmem>>, vector<32x32xbf16>
      %cst_31 = arith.constant dense<0.000000e+00> : vector<128x32xf32>
      %47 = tpu.matmul %45, %46, %cst_31 {dimension_numbers = #tpu.dot_dimension_numbers<[1], [0], [0], [1], [0, 0, 1, 1], [], []>} : vector<128x32xbf16>, vector<32x32xbf16>, vector<128x32xf32> -> vector<128x32xf32>
      %c0_32 = arith.constant 0 : index
      %c0_33 = arith.constant 0 : index
      %48 = vector.load %arg6[%c0_32, %c0_33] : memref<1x32xf32, #tpu.memory_space<vmem>>, vector<1x32xf32>
      %49 = vector.broadcast %48 : vector<1x32xf32> to vector<128x32xf32>
      %50 = arith.addf %47, %49 : vector<128x32xf32>
      %51 = arith.truncf %50 : vector<128x32xf32> to vector<128x32xbf16>
      %c0_34 = arith.constant 0 : index
      %c0_35 = arith.constant 0 : index
      %52 = vector.load %arg10[%c0_34, %c0_35] : memref<128x32xbf16, #tpu.memory_space<vmem>>, vector<128x32xbf16>
      tpu.vector_store %arg10[%c0_34, %c0_35], %51 {strides = array<i32>} : memref<128x32xbf16, #tpu.memory_space<vmem>>, vector<128x32xbf16>,
      %cst_36 = arith.constant 0xFF800000 : f32
      %53 = vector.broadcast %cst_36 : f32 to vector<128x1xf32>
      %c0_37 = arith.constant 0 : index
      %c0_38 = arith.constant 0 : index
      %54 = vector.load %arg11[%c0_37, %c0_38] : memref<128x1xf32, #tpu.memory_space<vmem>>, vector<128x1xf32>
      tpu.vector_store %arg11[%c0_37, %c0_38], %53 {strides = array<i32>} : memref<128x1xf32, #tpu.memory_space<vmem>>, vector<128x1xf32>,
      %cst_39 = arith.constant 0.000000e+00 : f32
      %55 = vector.broadcast %cst_39 : f32 to vector<128x1xf32>
      %c0_40 = arith.constant 0 : index
      %c0_41 = arith.constant 0 : index
      %56 = vector.load %arg12[%c0_40, %c0_41] : memref<128x1xf32, #tpu.memory_space<vmem>>, vector<128x1xf32>
      tpu.vector_store %arg12[%c0_40, %c0_41], %55 {strides = array<i32>} : memref<128x1xf32, #tpu.memory_space<vmem>>, vector<128x1xf32>,
      %cst_42 = arith.constant 0.000000e+00 : f32
      %57 = vector.broadcast %cst_42 : f32 to vector<128x32xf32>
      %c0_43 = arith.constant 0 : index
      %c0_44 = arith.constant 0 : index
      %58 = vector.load %arg13[%c0_43, %c0_44] : memref<128x32xf32, #tpu.memory_space<vmem>>, vector<128x32xf32>
      tpu.vector_store %arg13[%c0_43, %c0_44], %57 {strides = array<i32>} : memref<128x32xf32, #tpu.memory_space<vmem>>, vector<128x32xf32>,
    } else {
    }
    %c0 = arith.constant 0 : index
    %c0_1 = arith.constant 0 : index
    %c0_2 = arith.constant 0 : index
    %3 = vector.load %arg4[%c0, %c0_1, %c0_2] : memref<1x128x32xf32, #tpu.memory_space<vmem>>, vector<1x128x32xf32>
    %4 = vector.shape_cast %3 : vector<1x128x32xf32> to vector<128x32xf32>
    %5 = arith.truncf %4 : vector<128x32xf32> to vector<128x32xbf16>
    %c0_3 = arith.constant 0 : index
    %c0_4 = arith.constant 0 : index
    %6 = vector.load %arg7[%c0_3, %c0_4] : memref<32x64xbf16, #tpu.memory_space<vmem>>, vector<32x64xbf16>
    %cst = arith.constant dense<0.000000e+00> : vector<128x64xf32>
    %7 = tpu.matmul %5, %6, %cst {dimension_numbers = #tpu.dot_dimension_numbers<[1], [0], [0], [1], [0, 0, 1, 1], [], []>} : vector<128x32xbf16>, vector<32x64xbf16>, vector<128x64xf32> -> vector<128x64xf32>
    %c0_5 = arith.constant 0 : index
    %c0_6 = arith.constant 0 : index
    %8 = vector.load %arg8[%c0_5, %c0_6] : memref<1x64xf32, #tpu.memory_space<vmem>>, vector<1x64xf32>
    %9 = vector.broadcast %8 : vector<1x64xf32> to vector<128x64xf32>
    %10 = arith.addf %7, %9 : vector<128x64xf32>
    %11 = vector.extract_strided_slice %10 {offsets = [0, 0], sizes = [128, 32], strides = [1, 1]} : vector<128x64xf32> to vector<128x32xf32>
    %12 = arith.truncf %11 : vector<128x32xf32> to vector<128x32xbf16>
    %13 = vector.extract_strided_slice %10 {offsets = [0, 32], sizes = [128, 32], strides = [1, 1]} : vector<128x64xf32> to vector<128x32xf32>
    %14 = arith.truncf %13 : vector<128x32xf32> to vector<128x32xbf16>
    %c0_7 = arith.constant 0 : index
    %c0_8 = arith.constant 0 : index
    %15 = vector.load %arg10[%c0_7, %c0_8] : memref<128x32xbf16, #tpu.memory_space<vmem>>, vector<128x32xbf16>
    %cst_9 = arith.constant dense<0.000000e+00> : vector<128x128xf32>
    %16 = tpu.matmul %15, %12, %cst_9 {dimension_numbers = #tpu.dot_dimension_numbers<[1], [1], [0], [0], [0, 0, 1, 0], [], []>} : vector<128x32xbf16>, vector<128x32xbf16>, vector<128x128xf32> -> vector<128x128xf32>
    %c0_10 = arith.constant 0 : index
    %c0_11 = arith.constant 0 : index
    %17 = vector.load %arg11[%c0_10, %c0_11] : memref<128x1xf32, #tpu.memory_space<vmem>>, vector<128x1xf32>
    %cst_12 = arith.constant dense<0xFF800000> : vector<128xf32>
    %18 = vector.multi_reduction <maximumf>, %16, %cst_12 [1] : vector<128x128xf32> to vector<128xf32>
    %19 = vector.shape_cast %18 : vector<128xf32> to vector<128x1xf32>
    %20 = arith.maximumf %17, %19 : vector<128x1xf32>
    %21 = arith.subf %17, %20 : vector<128x1xf32>
    %22 = math.exp %21 : vector<128x1xf32>
    %23 = vector.broadcast %20 : vector<128x1xf32> to vector<128x128xf32>
    %24 = arith.subf %16, %23 : vector<128x128xf32>
    %25 = math.exp %24 : vector<128x128xf32>
    %c0_13 = arith.constant 0 : index
    %c0_14 = arith.constant 0 : index
    %26 = vector.load %arg12[%c0_13, %c0_14] : memref<128x1xf32, #tpu.memory_space<vmem>>, vector<128x1xf32>
    %27 = arith.mulf %22, %26 : vector<128x1xf32>
    %cst_15 = arith.constant dense<0.000000e+00> : vector<128xf32>
    %28 = vector.multi_reduction <add>, %25, %cst_15 [1] : vector<128x128xf32> to vector<128xf32>
    %29 = vector.shape_cast %28 : vector<128xf32> to vector<128x1xf32>
    %30 = arith.addf %27, %29 : vector<128x1xf32>
    %c0_16 = arith.constant 0 : index
    %c0_17 = arith.constant 0 : index
    %31 = vector.load %arg12[%c0_16, %c0_17] : memref<128x1xf32, #tpu.memory_space<vmem>>, vector<128x1xf32>
    tpu.vector_store %arg12[%c0_16, %c0_17], %30 {strides = array<i32>} : memref<128x1xf32, #tpu.memory_space<vmem>>, vector<128x1xf32>,
    %c0_18 = arith.constant 0 : index
    %c0_19 = arith.constant 0 : index
    %32 = vector.load %arg13[%c0_18, %c0_19] : memref<128x32xf32, #tpu.memory_space<vmem>>, vector<128x32xf32>
    %33 = vector.broadcast %22 : vector<128x1xf32> to vector<128x32xf32>
    %34 = arith.mulf %33, %32 : vector<128x32xf32>
    %35 = arith.truncf %25 : vector<128x128xf32> to vector<128x128xbf16>
    %cst_20 = arith.constant dense<0.000000e+00> : vector<128x32xf32>
    %36 = tpu.matmul %35, %14, %cst_20 {dimension_numbers = #tpu.dot_dimension_numbers<[1], [0], [0], [1], [0, 0, 1, 1], [], []>} : vector<128x128xbf16>, vector<128x32xbf16>, vector<128x32xf32> -> vector<128x32xf32>
    %37 = arith.addf %34, %36 : vector<128x32xf32>
    %c0_21 = arith.constant 0 : index
    %c0_22 = arith.constant 0 : index
    %38 = vector.load %arg13[%c0_21, %c0_22] : memref<128x32xf32, #tpu.memory_space<vmem>>, vector<128x32xf32>
    tpu.vector_store %arg13[%c0_21, %c0_22], %37 {strides = array<i32>} : memref<128x32xf32, #tpu.memory_space<vmem>>, vector<128x32xf32>,
    %c0_23 = arith.constant 0 : index
    %c0_24 = arith.constant 0 : index
    %39 = vector.load %arg11[%c0_23, %c0_24] : memref<128x1xf32, #tpu.memory_space<vmem>>, vector<128x1xf32>
    tpu.vector_store %arg11[%c0_23, %c0_24], %20 {strides = array<i32>} : memref<128x1xf32, #tpu.memory_space<vmem>>, vector<128x1xf32>,
    %c1_i32 = arith.constant 1 : i32
    %40 = arith.cmpi eq, %arg2, %c1_i32 : i32
    %41 = arith.extui %40 : i1 to i32
    %c0_i32_25 = arith.constant 0 : i32
    %42 = arith.cmpi ne, %41, %c0_i32_25 : i32
    scf.if %42 {
      %c0_26 = arith.constant 0 : index
      %c0_27 = arith.constant 0 : index
      %43 = vector.load %arg12[%c0_26, %c0_27] : memref<128x1xf32, #tpu.memory_space<vmem>>, vector<128x1xf32>
      %44 = tpu.reciprocal %43 {approx = true} : vector<128x1xf32> -> vector<128x1xf32>
      %c0_28 = arith.constant 0 : index
      %c0_29 = arith.constant 0 : index
      %45 = vector.load %arg13[%c0_28, %c0_29] : memref<128x32xf32, #tpu.memory_space<vmem>>, vector<128x32xf32>
      %46 = vector.broadcast %44 : vector<128x1xf32> to vector<128x32xf32>
      %47 = arith.mulf %45, %46 : vector<128x32xf32>
      %c0_30 = arith.constant 0 : index
      %c0_31 = arith.constant 0 : index
      %c0_32 = arith.constant 0 : index
      %48 = vector.load %arg3[%c0_30, %c0_31, %c0_32] : memref<1x128x32xf32, #tpu.memory_space<vmem>>, vector<1x128x32xf32>
      %49 = vector.shape_cast %48 : vector<1x128x32xf32> to vector<128x32xf32>
      %50 = arith.addf %47, %49 : vector<128x32xf32>
      %c0_33 = arith.constant 0 : index
      %c0_34 = arith.constant 0 : index
      %c0_35 = arith.constant 0 : index
      %51 = vector.load %arg9[%c0_33, %c0_34, %c0_35] : memref<1x128x32xf32, #tpu.memory_space<vmem>>, vector<1x128x32xf32>
      %52 = vector.shape_cast %51 : vector<1x128x32xf32> to vector<128x32xf32>
      %53 = vector.shape_cast %50 : vector<128x32xf32> to vector<1x128x32xf32>
      tpu.vector_store %arg9[%c0_33, %c0_34, %c0_35], %53 {strides = array<i32>} : memref<1x128x32xf32, #tpu.memory_space<vmem>>, vector<1x128x32xf32>,
    } else {
    }
    return
  }
  func.func @transform_0(%arg0: i32, %arg1: i32, %arg2: i32) -> (i32, i32, i32) {
    %c0_i32 = arith.constant 0 : i32
    %c0_i32_0 = arith.constant 0 : i32
    return %arg0, %arg1, %c0_i32 : i32, i32, i32
  }
  func.func @transform_1(%arg0: i32, %arg1: i32, %arg2: i32) -> (i32, i32, i32) {
    %c0_i32 = arith.constant 0 : i32
    %c0_i32_0 = arith.constant 0 : i32
    return %arg0, %arg2, %c0_i32 : i32, i32, i32
  }
  func.func @transform_2(%arg0: i32, %arg1: i32, %arg2: i32) -> (i32, i32) {
    %c0_i32 = arith.constant 0 : i32
    %c0_i32_0 = arith.constant 0 : i32
    %c0_i32_1 = arith.constant 0 : i32
    return %c0_i32, %c0_i32_0 : i32, i32
  }
  func.func @transform_3(%arg0: i32, %arg1: i32, %arg2: i32) -> (i32, i32) {
    %c0_i32 = arith.constant 0 : i32
    %c0_i32_0 = arith.constant 0 : i32
    %c0_i32_1 = arith.constant 0 : i32
    return %c0_i32, %c0_i32_0 : i32, i32
  }
  func.func @transform_4(%arg0: i32, %arg1: i32, %arg2: i32) -> (i32, i32) {
    %c0_i32 = arith.constant 0 : i32
    %c0_i32_0 = arith.constant 0 : i32
    %c0_i32_1 = arith.constant 0 : i32
    return %c0_i32, %c0_i32_0 : i32, i32
  }
  func.func @transform_5(%arg0: i32, %arg1: i32, %arg2: i32) -> (i32, i32) {
    %c0_i32 = arith.constant 0 : i32
    %c0_i32_0 = arith.constant 0 : i32
    %c0_i32_1 = arith.constant 0 : i32
    return %c0_i32, %c0_i32_0 : i32, i32
  }
  func.func @transform_6(%arg0: i32, %arg1: i32, %arg2: i32) -> (i32, i32, i32) {
    %c0_i32 = arith.constant 0 : i32
    %c0_i32_0 = arith.constant 0 : i32
    return %arg0, %arg1, %c0_i32 : i32, i32, i32
  }
}

</mosaic_0001>

<llo_original>
// kernel: tpu_custom_call.1
$region0: #{tpu_custom_call.1}
  #allocation0 [shape = 'u32[]', space=smem, size = 0x4, offset = 0x4, fixed_abs, tag = 'smem constant byte address 0x4 - core index']
  #allocation1 [shape = 'u32[72,128]{1,0:T(1,128)}', space=vmem, size = 0x9000, scoped, tag = 'internal scratch']
  #allocation2 [shape = 'bf16[128,32]{1,0:T(8,128)(2,1)}', space=vmem, size = 0x8000, scoped, tag = 'scratch operand']
  #allocation3 [shape = 'f32[128,1]{1,0:T(8,128)}', space=vmem, size = 0x10000, scoped, tag = 'scratch operand']
  #allocation4 [shape = 'f32[128,1]{1,0:T(8,128)}', space=vmem, size = 0x10000, scoped, tag = 'scratch operand']
  #allocation5 [shape = 'f32[128,32]{1,0:T(8,128)}', space=vmem, size = 0x10000, scoped, tag = 'scratch operand']
  %s0 = inlined_call_operand.vmem [shape: f32[2,256,32], index: 0, kind: input, shape index: {}]
  %s1 = inlined_call_operand.vmem [shape: f32[2,256,32], index: 1, kind: input, shape index: {}]
  %s2 = inlined_call_operand.vmem [shape: bf16[32,32], index: 2, kind: input, shape index: {}]
  %s3 = inlined_call_operand.vmem [shape: f32[1,32], index: 3, kind: input, shape index: {}]
  %s4 = inlined_call_operand.vmem [shape: bf16[32,64], index: 4, kind: input, shape index: {}]
  %s5 = inlined_call_operand.vmem [shape: f32[1,64], index: 5, kind: input, shape index: {}]
  %s6 = inlined_call_operand.vmem [shape: f32[2,256,32], index: 6, kind: output, shape index: {}]
  %s7 = sld [smem:[#allocation0]]
  $region65: #{tpu_custom_call.1} parent=0
    _
  %s9 = ssub.s32 1, %s7
  %s10 = scalar_select 0, %s9, %s7
  loop: start=0, step=1, limit=10
  $region2: #{tpu_custom_call.1} parent=0 // loop_pre_header
    _
  $region3: #{tpu_custom_call.1} parent=0 // loop_header
    %s12 = sphi 0, %s16
    %p13 = scmp.ge.s32.totalorder %s12, 10
    %s19 = sphi 0, %s38
    %s20 = sphi 0, %s34
    %s21 = sphi 0, %s30
    %s22 = sphi 0, %s19
    %s23 = sphi 0, %s20
    %s24 = sphi 0, %s21
    %s25 = sphi 0, %s22
    %s26 = sphi 0, %s23
    %s27 = sphi 0, %s24
    %s43 = sphi 0, %s45
    %s46 = sphi 0, %s43
    %s47 = sphi 0, %s46
    %s63 = sphi 0, %s47
    %s71 = sphi 0, %s73
    %s74 = sphi 0, %s71
    %s75 = sphi 0, %s74
    %s91 = sphi 0, %s75
    %s95 = sphi 0, %s95
    %s97 = sphi 0, %s95
    %s98 = sphi 0, %s97
    %s112 = sphi 0, %s98
    %s116 = sphi 0, %s116
    %s118 = sphi 0, %s116
    %s119 = sphi 0, %s118
    %s133 = sphi 0, %s119
    %s137 = sphi 0, %s137
    %s139 = sphi 0, %s137
    %s140 = sphi 0, %s139
    %s154 = sphi 0, %s140
    %s158 = sphi 0, %s158
    %s160 = sphi 0, %s158
    %s161 = sphi 0, %s160
    %s175 = sphi 0, %s161
    %s183 = sphi 0, %s185
    %s186 = sphi 0, %s183
    %s187 = sphi 0, %s186
    %s203 = sphi 0, %s187
  $region4: #{tpu_custom_call.1} parent=0 // loop_header_branch
    %15 = sbr.rel (%p13) target = $region8
  $region5: #{tpu_custom_call.1} parent=0 // loop_body
    %s17 = ssub.s32 %s12, 1
    %s18 = ssub.s32 %s12, 2
    %s28 = sadd.s32 1, %s21
    %p29 = scmp.ge.s32.totalorder %s28, 2
    %s30 = scalar_select %p29, 0, %s28
    %s31 = sadd.s32 1, %s20
    %s32 = scalar_select %p29, %s31, %s20
    %p33 = scmp.ge.s32.totalorder %s32, 2
    %s34 = scalar_select %p33, 0, %s32
    %s35 = sadd.s32 1, %s19
    %s36 = scalar_select %p33, %s35, %s19
    %p37 = scmp.ge.s32.totalorder %s36, 2
    %s38 = scalar_select %p37, 0, %s36
    %s39 = ssub.s32 %s19, %s38
    %s40 = ssub.s32 %s20, %s34
    %s41 = sor.u32 %s39, %s40
    %p42 = scmp.eq.s32.totalorder %s41, 0
    %s44 = sadd.s32 %s43, 1
    %s45 = scalar_select %p42, %s43, %s44
    %p48 = pneg %p42
    %p49 = scmp.eq.s32.totalorder %s12, 7
    %p50 = por %p48, %p49
    %p51 = scmp.ne.s32.totalorder %s43, %s46
    %p52 = scmp.eq.s32.totalorder %s12, 0
    %p53 = por %p51, %p52
    %p54 = scmp.ne.s32.totalorder %s43, %s46
    %p55 = scmp.eq.s32.totalorder %s17, 7
    %p56 = por %p54, %p55
    %p57 = scmp.ne.s32.totalorder %s46, %s47
    %p58 = scmp.eq.s32.totalorder %s17, 0
    %p59 = por %p57, %p58
    %p60 = scmp.ne.s32.totalorder %s46, %s47
    %p61 = scmp.eq.s32.totalorder %s18, 7
    %p62 = por %p60, %p61
    %p64 = scmp.ne.s32.totalorder %s47, %s63
    %p65 = scmp.eq.s32.totalorder %s18, 0
    %p66 = por %p64, %p65
    %s67 = ssub.s32 %s19, %s38
    %s68 = ssub.s32 %s21, %s30
    %s69 = sor.u32 %s67, %s68
    %p70 = scmp.eq.s32.totalorder %s69, 0
    %s72 = sadd.s32 %s71, 1
    %s73 = scalar_select %p70, %s71, %s72
    %p76 = pneg %p70
    %p77 = scmp.eq.s32.totalorder %s12, 7
    %p78 = por %p76, %p77
    %p79 = scmp.ne.s32.totalorder %s71, %s74
    %p80 = scmp.eq.s32.totalorder %s12, 0
    %p81 = por %p79, %p80
    %p82 = scmp.ne.s32.totalorder %s71, %s74
    %p83 = scmp.eq.s32.totalorder %s17, 7
    %p84 = por %p82, %p83
    %p85 = scmp.ne.s32.totalorder %s74, %s75
    %p86 = scmp.eq.s32.totalorder %s17, 0
    %p87 = por %p85, %p86
    %p88 = scmp.ne.s32.totalorder %s74, %s75
    %p89 = scmp.eq.s32.totalorder %s18, 7
    %p90 = por %p88, %p89
    %p92 = scmp.ne.s32.totalorder %s75, %s91
    %p93 = scmp.eq.s32.totalorder %s18, 0
    %p94 = por %p92, %p93
    %s96 = sadd.s32 %s95, 1
    %p99 = scmp.eq.s32.totalorder %s12, 7
    %p100 = scmp.ne.s32.totalorder %s95, %s97
    %p101 = scmp.eq.s32.totalorder %s12, 0
    %p102 = por %p100, %p101
    %p103 = scmp.ne.s32.totalorder %s95, %s97
    %p104 = scmp.eq.s32.totalorder %s17, 7
    %p105 = por %p103, %p104
    %p106 = scmp.ne.s32.totalorder %s97, %s98
    %p107 = scmp.eq.s32.totalorder %s17, 0
    %p108 = por %p106, %p107
    %p109 = scmp.ne.s32.totalorder %s97, %s98
    %p110 = scmp.eq.s32.totalorder %s18, 7
    %p111 = por %p109, %p110
    %p113 = scmp.ne.s32.totalorder %s98, %s112
    %p114 = scmp.eq.s32.totalorder %s18, 0
    %p115 = por %p113, %p114
    %s117 = sadd.s32 %s116, 1
    %p120 = scmp.eq.s32.totalorder %s12, 7
    %p121 = scmp.ne.s32.totalorder %s116, %s118
    %p122 = scmp.eq.s32.totalorder %s12, 0
    %p123 = por %p121, %p122
    %p124 = scmp.ne.s32.totalorder %s116, %s118
    %p125 = scmp.eq.s32.totalorder %s17, 7
    %p126 = por %p124, %p125
    %p127 = scmp.ne.s32.totalorder %s118, %s119
    %p128 = scmp.eq.s32.totalorder %s17, 0
    %p129 = por %p127, %p128
    %p130 = scmp.ne.s32.totalorder %s118, %s119
    %p131 = scmp.eq.s32.totalorder %s18, 7
    %p132 = por %p130, %p131
    %p134 = scmp.ne.s32.totalorder %s119, %s133
    %p135 = scmp.eq.s32.totalorder %s18, 0
    %p136 = por %p134, %p135
    %s138 = sadd.s32 %s137, 1
    %p141 = scmp.eq.s32.totalorder %s12, 7
    %p142 = scmp.ne.s32.totalorder %s137, %s139
    %p143 = scmp.eq.s32.totalorder %s12, 0
    %p144 = por %p142, %p143
    %p145 = scmp.ne.s32.totalorder %s137, %s139
    %p146 = scmp.eq.s32.totalorder %s17, 7
    %p147 = por %p145, %p146
    %p148 = scmp.ne.s32.totalorder %s139, %s140
    %p149 = scmp.eq.s32.totalorder %s17, 0
    %p150 = por %p148, %p149
    %p151 = scmp.ne.s32.totalorder %s139, %s140
    %p152 = scmp.eq.s32.totalorder %s18, 7
    %p153 = por %p151, %p152
    %p155 = scmp.ne.s32.totalorder %s140, %s154
    %p156 = scmp.eq.s32.totalorder %s18, 0
    %p157 = por %p155, %p156
    %s159 = sadd.s32 %s158, 1
    %p162 = scmp.eq.s32.totalorder %s12, 7
    %p163 = scmp.ne.s32.totalorder %s158, %s160
    %p164 = scmp.eq.s32.totalorder %s12, 0
    %p165 = por %p163, %p164
    %p166 = scmp.ne.s32.totalorder %s158, %s160
    %p167 = scmp.eq.s32.totalorder %s17, 7
    %p168 = por %p166, %p167
    %p169 = scmp.ne.s32.totalorder %s160, %s161
    %p170 = scmp.eq.s32.totalorder %s17, 0
    %p171 = por %p169, %p170
    %p172 = scmp.ne.s32.totalorder %s160, %s161
    %p173 = scmp.eq.s32.totalorder %s18, 7
    %p174 = por %p172, %p173
    %p176 = scmp.ne.s32.totalorder %s161, %s175
    %p177 = scmp.eq.s32.totalorder %s18, 0
    %p178 = por %p176, %p177
    %s179 = ssub.s32 %s19, %s38
    %s180 = ssub.s32 %s20, %s34
    %s181 = sor.u32 %s179, %s180
    %p182 = scmp.eq.s32.totalorder %s181, 0
    %s184 = sadd.s32 %s183, 1
    %s185 = scalar_select %p182, %s183, %s184
    %p188 = pneg %p182
    %p189 = scmp.eq.s32.totalorder %s12, 7
    %p190 = por %p188, %p189
    %p191 = scmp.ne.s32.totalorder %s183, %s186
    %p192 = scmp.eq.s32.totalorder %s12, 0
    %p193 = por %p191, %p192
    %p194 = scmp.ne.s32.totalorder %s183, %s186
    %p195 = scmp.eq.s32.totalorder %s17, 7
    %p196 = por %p194, %p195
    %p197 = scmp.ne.s32.totalorder %s186, %s187
    %p198 = scmp.eq.s32.totalorder %s17, 0
    %p199 = por %p197, %p198
    %p200 = scmp.ne.s32.totalorder %s186, %s187
    %p201 = scmp.eq.s32.totalorder %s18, 7
    %p202 = por %p200, %p201
    %p204 = scmp.ne.s32.totalorder %s187, %s203
    %p205 = scmp.eq.s32.totalorder %s18, 0
    %p206 = por %p204, %p205
    %p207 = scmp.le.s32.totalorder 1, %s12
    %p208 = scmp.lt.s32.totalorder %s12, 9
    %p209 = pnand %p207, %p208
    %p210 = pneg %p209
    // Predicated region
    $region9: #{tpu_custom_call.1} parent=5 // pred_check
      _
    $region10: #{tpu_custom_call.1} parent=5 // pred_check_branch
      %212 = sbr.rel (%p209) target = $region12
    $region11: #{tpu_custom_call.1} parent=5 // pred_region
      %s213 = ssub.s32 %s12, 1
      // Predicated region
      $region13: #{tpu_custom_call.1} parent=11 // pred_check
        %p214 = pneg %p108
      $region14: #{tpu_custom_call.1} parent=11 // pred_check_branch
        %216 = sbr.rel (%p214) target = $region16
      $region15: #{tpu_custom_call.1} parent=11 // pred_region
        _
      $region16: #{tpu_custom_call.1} parent=11 // pred_fallthru
        _
      // Predicated region
      $region17: #{tpu_custom_call.1} parent=11 // pred_check
        %p217 = pneg %p129
      $region18: #{tpu_custom_call.1} parent=11 // pred_check_branch
        %219 = sbr.rel (%p217) target = $region20
      $region19: #{tpu_custom_call.1} parent=11 // pred_region
        _
      $region20: #{tpu_custom_call.1} parent=11 // pred_fallthru
        _
      // Predicated region
      $region21: #{tpu_custom_call.1} parent=11 // pred_check
        %p220 = pneg %p150
      $region22: #{tpu_custom_call.1} parent=11 // pred_check_branch
        %222 = sbr.rel (%p220) target = $region24
      $region23: #{tpu_custom_call.1} parent=11 // pred_region
        _
      $region24: #{tpu_custom_call.1} parent=11 // pred_fallthru
        _
      // Predicated region
      $region25: #{tpu_custom_call.1} parent=11 // pred_check
        %p223 = pneg %p171
      $region26: #{tpu_custom_call.1} parent=11 // pred_check_branch
        %225 = sbr.rel (%p223) target = $region28
      $region27: #{tpu_custom_call.1} parent=11 // pred_region
        _
      $region28: #{tpu_custom_call.1} parent=11 // pred_fallthru
        _
    $region12: #{tpu_custom_call.1} parent=5 // pred_fallthru
      _
    %p226 = scmp.lt.s32.totalorder %s12, 8
    // Predicated region
    $region29: #{tpu_custom_call.1} parent=5 // pred_check
      %p227 = pneg %p226
    $region30: #{tpu_custom_call.1} parent=5 // pred_check_branch
      %229 = sbr.rel (%p227) target = $region32
    $region31: #{tpu_custom_call.1} parent=5 // pred_region
      // Predicated region
      $region33: #{tpu_custom_call.1} parent=31 // pred_check
        %p230 = pneg %p53
      $region34: #{tpu_custom_call.1} parent=31 // pred_check_branch
        %232 = sbr.rel (%p230) target = $region36
      $region35: #{tpu_custom_call.1} parent=31 // pred_region
        %s233 = smul.u32 16, %s20
        %p234 = scmp.lt.s32.totalorder %s19, 1
        %s235 = scalar_select %p234, %s19, 1
        %p236 = scmp.lt.s32.totalorder %s233, 31
        %s237 = scalar_select %p236, %s233, 31
        %s238 = smul.addr %s235, 32
        %s239 = sadd.s32 %s237, %s238
        %s240 = smul.addr %s239, 8
        %s241 = scalar_lea.vmem %s0, %s240
        %s242 = smul.u32 16, %s20
      $region36: #{tpu_custom_call.1} parent=31 // pred_fallthru
        _
      // Predicated region
      $region37: #{tpu_custom_call.1} parent=31 // pred_check
        %p243 = pneg %p81
      $region38: #{tpu_custom_call.1} parent=31 // pred_check_branch
        %245 = sbr.rel (%p243) target = $region40
      $region39: #{tpu_custom_call.1} parent=31 // pred_region
        %s246 = smul.u32 16, %s21
        %p247 = scmp.lt.s32.totalorder %s19, 1
        %s248 = scalar_select %p247, %s19, 1
        %p249 = scmp.lt.s32.totalorder %s246, 31
        %s250 = scalar_select %p249, %s246, 31
        %s251 = smul.addr %s248, 32
        %s252 = sadd.s32 %s250, %s251
        %s253 = smul.addr %s252, 8
        %s254 = scalar_lea.vmem %s1, %s253
        %s255 = smul.u32 16, %s21
      $region40: #{tpu_custom_call.1} parent=31 // pred_fallthru
        _
    $region32: #{tpu_custom_call.1} parent=5 // pred_fallthru
      _
    %p256 = scmp.le.s32.totalorder 1, %s12
    %p257 = scmp.lt.s32.totalorder %s12, 9
    %p258 = pnand %p256, %p257
    %p259 = pneg %p258
    // Predicated region
    $region41: #{tpu_custom_call.1} parent=5 // pred_check
      _
    $region42: #{tpu_custom_call.1} parent=5 // pred_check_branch
      %261 = sbr.rel (%p258) target = $region44
    $region43: #{tpu_custom_call.1} parent=5 // pred_region
      %s262 = ssub.s32 %s12, 1
      %s263 = smul.u32 16, %s23
      %p264 = scmp.lt.s32.totalorder %s22, 1
      %s265 = scalar_select %p264, %s22, 1
      %p266 = scmp.lt.s32.totalorder %s263, 31
      %s267 = scalar_select %p266, %s263, 31
      %s268 = smul.addr %s265, 32
      %s269 = sadd.s32 %s267, %s268
      %s270 = smul.addr %s269, 8
      %s271 = scalar_lea.vmem %s0, %s270
      %p272 = pneg %p59
      %p273 = pneg %p56
      %s274 = smul.u32 16, %s24
      %p275 = scmp.lt.s32.totalorder %s22, 1
      %s276 = scalar_select %p275, %s22, 1
      %p277 = scmp.lt.s32.totalorder %s274, 31
      %s278 = scalar_select %p277, %s274, 31
      %s279 = smul.addr %s276, 32
      %s280 = sadd.s32 %s278, %s279
      %s281 = smul.addr %s280, 8
      %s282 = scalar_lea.vmem %s1, %s281
      %p283 = pneg %p87
      %p284 = pneg %p84
      %p285 = pneg %p108
      %p286 = pneg %p105
      %p287 = pneg %p129
      %p288 = pneg %p126
      %p289 = pneg %p150
      %p290 = pneg %p147
      %p291 = pneg %p171
      %p292 = pneg %p168
      %p293 = pneg %p199
      %p294 = pneg %p196
      %s295 = smul.u32 16, %s23
      %p296 = scmp.lt.s32.totalorder %s22, 1
      %s297 = scalar_select %p296, %s22, 1
      %p298 = scmp.lt.s32.totalorder %s295, 31
      %s299 = scalar_select %p298, %s295, 31
      %s300 = smul.addr %s297, 32
      %s301 = sadd.s32 %s299, %s300
      %s302 = smul.addr %s301, 8
      %s303 = scalar_lea.vmem %s6, %s302
      %s304 = smul.u32 16, %s23
      %p305 = scmp.lt.s32.totalorder %s22, 1
      %s306 = scalar_select %p305, %s22, 1
      %p307 = scmp.lt.s32.totalorder %s304, 31
      %s308 = scalar_select %p307, %s304, 31
      %s309 = smul.addr %s306, 32
      %s310 = sadd.s32 %s308, %s309
      %s311 = smul.addr %s310, 8
      %s312 = scalar_lea.vmem %s0, %s311
      %s313 = smul.u32 16, %s23
      %s314 = smul.u32 16, %s24
      %p315 = scmp.lt.s32.totalorder %s22, 1
      %s316 = scalar_select %p315, %s22, 1
      %p317 = scmp.lt.s32.totalorder %s314, 31
      %s318 = scalar_select %p317, %s314, 31
      %s319 = smul.addr %s316, 32
      %s320 = sadd.s32 %s318, %s319
      %s321 = smul.addr %s320, 8
      %s322 = scalar_lea.vmem %s1, %s321
      %s323 = smul.u32 16, %s24
      %s324 = smul.u32 16, %s23
      %p325 = scmp.lt.s32.totalorder %s22, 1
      %s326 = scalar_select %p325, %s22, 1
      %p327 = scmp.lt.s32.totalorder %s324, 31
      %s328 = scalar_select %p327, %s324, 31
      %s329 = smul.addr %s326, 32
      %s330 = sadd.s32 %s328, %s329
      %s331 = smul.addr %s330, 8
      %s332 = scalar_lea.vmem %s6, %s331
      %s333 = smul.u32 16, %s23
      %p335 = scmp.eq.s32.totalorder %s24, 0
      // Predicated region
      $region45: #{tpu_custom_call.1} parent=43 // pred_check
        %p336 = pneg %p335
      $region46: #{tpu_custom_call.1} parent=43 // pred_check_branch
        %338 = sbr.rel (%p336) target = $region48
      $region47: #{tpu_custom_call.1} parent=43 // pred_region
        %v339 = vld [vmem:[%s312] sm:$0xff]
        %v340 = vld [vmem:[%s312 + $0x8] sm:$0xff]
        %v341 = vld [vmem:[%s312 + $0x10] sm:$0xff]
        %v342 = vld [vmem:[%s312 + $0x18] sm:$0xff]
        %v343 = vld [vmem:[%s312 + $0x20] sm:$0xff]
        %v344 = vld [vmem:[%s312 + $0x28] sm:$0xff]
        %v345 = vld [vmem:[%s312 + $0x30] sm:$0xff]
        %v346 = vld [vmem:[%s312 + $0x38] sm:$0xff]
        %v347 = vld [vmem:[%s312 + $0x40] sm:$0xff]
        %v348 = vld [vmem:[%s312 + $0x48] sm:$0xff]
        %v349 = vld [vmem:[%s312 + $0x50] sm:$0xff]
        %v350 = vld [vmem:[%s312 + $0x58] sm:$0xff]
        %v351 = vld [vmem:[%s312 + $0x60] sm:$0xff]
        %v352 = vld [vmem:[%s312 + $0x68] sm:$0xff]
        %v353 = vld [vmem:[%s312 + $0x70] sm:$0xff]
        %v354 = vld [vmem:[%s312 + $0x78] sm:$0xff]
        %v355 = vpack.c.bf16 %v340, %v339
        %v356 = vpack.c.bf16 %v342, %v341
        %v357 = vpack.c.bf16 %v344, %v343
        %v358 = vpack.c.bf16 %v346, %v345
        %v359 = vpack.c.bf16 %v348, %v347
        %v360 = vpack.c.bf16 %v350, %v349
        %v361 = vpack.c.bf16 %v352, %v351
        %v362 = vpack.c.bf16 %v354, %v353
        %v363 = vld [vmem:[%s2] sm:$0xf]
        %v364 = vld [vmem:[%s2 + $0x4] sm:$0xf]
        %v365 = vld [vmem:[%s2 + $0x8] sm:$0xf]
        %v366 = vld [vmem:[%s2 + $0xc] sm:$0xf]
        %v367 = vld [vmem:[%s3] sm:$0x1]
        %v369 = vperm.slane %v367, 0
        %v375 = vunpack.c.l.b16 %v363
        %v376 = vunpack.c.l.b16 %v364
        %v377 = vunpack.c.l.b16 %v365
        %v378 = vunpack.c.l.b16 %v366
        %v379 = vpack.c.b16 %v376, %v375
        %v380 = vpack.c.b16 %v378, %v377
        %vm383 = vcmask 261120
        %v385 = vsel %vm383, %v355, 0
        %v388 = vsel %vm383, %v356, 0
        %v391 = vsel %vm383, %v357, 0
        %v394 = vsel %vm383, %v358, 0
        %v397 = vsel %vm383, %v359, 0
        %v400 = vsel %vm383, %v360, 0
        %v403 = vsel %vm383, %v361, 0
        %v406 = vsel %vm383, %v362, 0
        %408 = vmatpush.bf16.msra.mxu0 0
        %409 = vmatpush.bf16.msra.mxu0 0
        %410 = vmatpush.bf16.msra.mxu0 0
        %411 = vmatpush.bf16.msra.mxu0 0
        %412 = vmatpush.bf16.msra.mxu0 0
        %413 = vmatpush.bf16.msra.mxu0 0
        %414 = vmatpush.bf16.msra.mxu0 %v380
        %415 = vmatpush.bf16.msra.mxu0 %v379
        %416 = vmatmul.bf16.gmra.mxu0 %v385
        %v417 = vpop.f32.mrf.mxu0
        %v418 = vadd.f32 %v369, %v417
        %v419 = vpop.f32.mrf.mxu0
        %v420 = vadd.f32 %v369, %v419
        %421 = vmatmul.bf16.gmra.mxu0 %v388
        %v422 = vpop.f32.mrf.mxu0
        %v423 = vadd.f32 %v369, %v422
        %v424 = vpop.f32.mrf.mxu0
        %v425 = vadd.f32 %v369, %v424
        %426 = vmatmul.bf16.gmra.mxu0 %v391
        %v427 = vpop.f32.mrf.mxu0
        %v428 = vadd.f32 %v369, %v427
        %v429 = vpop.f32.mrf.mxu0
        %v430 = vadd.f32 %v369, %v429
        %431 = vmatmul.bf16.gmra.mxu0 %v394
        %v432 = vpop.f32.mrf.mxu0
        %v433 = vadd.f32 %v369, %v432
        %v434 = vpop.f32.mrf.mxu0
        %v435 = vadd.f32 %v369, %v434
        %436 = vmatmul.bf16.gmra.mxu0 %v397
        %v437 = vpop.f32.mrf.mxu0
        %v438 = vadd.f32 %v369, %v437
        %v439 = vpop.f32.mrf.mxu0
        %v440 = vadd.f32 %v369, %v439
        %441 = vmatmul.bf16.gmra.mxu0 %v400
        %v442 = vpop.f32.mrf.mxu0
        %v443 = vadd.f32 %v369, %v442
        %v444 = vpop.f32.mrf.mxu0
        %v445 = vadd.f32 %v369, %v444
        %446 = vmatmul.bf16.gmra.mxu0 %v403
        %v447 = vpop.f32.mrf.mxu0
        %v448 = vadd.f32 %v369, %v447
        %v449 = vpop.f32.mrf.mxu0
        %v450 = vadd.f32 %v369, %v449
        %451 = vmatmul.bf16.gmra.mxu0 %v406
        %v452 = vpop.f32.mrf.mxu0
        %v453 = vadd.f32 %v369, %v452
        %v454 = vpop.f32.mrf.mxu0
        %v455 = vadd.f32 %v369, %v454
        %456 = vdwg.mxu0
        %v457 = vpack.c.bf16 %v418, %v418
        %v458 = vpack.c.bf16 %v420, %v420
        %v459 = vpack.c.bf16 %v423, %v423
        %v460 = vpack.c.bf16 %v425, %v425
        %v461 = vpack.c.bf16 %v428, %v428
        %v462 = vpack.c.bf16 %v430, %v430
        %v463 = vpack.c.bf16 %v433, %v433
        %v464 = vpack.c.bf16 %v435, %v435
        %v465 = vpack.c.bf16 %v438, %v438
        %v466 = vpack.c.bf16 %v440, %v440
        %v467 = vpack.c.bf16 %v443, %v443
        %v468 = vpack.c.bf16 %v445, %v445
        %v469 = vpack.c.bf16 %v448, %v448
        %v470 = vpack.c.bf16 %v450, %v450
        %v471 = vpack.c.bf16 %v453, %v453
        %v472 = vpack.c.bf16 %v455, %v455
        %vm473 = vcmask 257024
        %474 = vst.msk [vmem:[#allocation2] sm:$0xf] %vm473, %v457
        %475 = vst.msk [vmem:[#allocation2 + $0x4] sm:$0xf] %vm473, %v458
        %476 = vst.msk [vmem:[#allocation2 + $0x8] sm:$0xf] %vm473, %v459
        %477 = vst.msk [vmem:[#allocation2 + $0xc] sm:$0xf] %vm473, %v460
        %478 = vst.msk [vmem:[#allocation2 + $0x10] sm:$0xf] %vm473, %v461
        %479 = vst.msk [vmem:[#allocation2 + $0x14] sm:$0xf] %vm473, %v462
        %480 = vst.msk [vmem:[#allocation2 + $0x18] sm:$0xf] %vm473, %v463
        %481 = vst.msk [vmem:[#allocation2 + $0x1c] sm:$0xf] %vm473, %v464
        %482 = vst.msk [vmem:[#allocation2 + $0x20] sm:$0xf] %vm473, %v465
        %483 = vst.msk [vmem:[#allocation2 + $0x24] sm:$0xf] %vm473, %v466
        %484 = vst.msk [vmem:[#allocation2 + $0x28] sm:$0xf] %vm473, %v467
        %485 = vst.msk [vmem:[#allocation2 + $0x2c] sm:$0xf] %vm473, %v468
        %486 = vst.msk [vmem:[#allocation2 + $0x30] sm:$0xf] %vm473, %v469
        %487 = vst.msk [vmem:[#allocation2 + $0x34] sm:$0xf] %vm473, %v470
        %488 = vst.msk [vmem:[#allocation2 + $0x38] sm:$0xf] %vm473, %v471
        %489 = vst.msk [vmem:[#allocation2 + $0x3c] sm:$0xf] %vm473, %v472
        %vm490 = vcmask 7168
        %491 = vst.msk [vmem:[#allocation3] sm:$0xff] %vm490, -inf
        %492 = vst.msk [vmem:[#allocation3 + $0x8] sm:$0xff] %vm490, -inf
        %493 = vst.msk [vmem:[#allocation3 + $0x10] sm:$0xff] %vm490, -inf
        %494 = vst.msk [vmem:[#allocation3 + $0x18] sm:$0xff] %vm490, -inf
        %495 = vst.msk [vmem:[#allocation3 + $0x20] sm:$0xff] %vm490, -inf
        %496 = vst.msk [vmem:[#allocation3 + $0x28] sm:$0xff] %vm490, -inf
        %497 = vst.msk [vmem:[#allocation3 + $0x30] sm:$0xff] %vm490, -inf
        %498 = vst.msk [vmem:[#allocation3 + $0x38] sm:$0xff] %vm490, -inf
        %499 = vst.msk [vmem:[#allocation3 + $0x40] sm:$0xff] %vm490, -inf
        %500 = vst.msk [vmem:[#allocation3 + $0x48] sm:$0xff] %vm490, -inf
        %501 = vst.msk [vmem:[#allocation3 + $0x50] sm:$0xff] %vm490, -inf
        %502 = vst.msk [vmem:[#allocation3 + $0x58] sm:$0xff] %vm490, -inf
        %503 = vst.msk [vmem:[#allocation3 + $0x60] sm:$0xff] %vm490, -inf
        %504 = vst.msk [vmem:[#allocation3 + $0x68] sm:$0xff] %vm490, -inf
        %505 = vst.msk [vmem:[#allocation3 + $0x70] sm:$0xff] %vm490, -inf
        %506 = vst.msk [vmem:[#allocation3 + $0x78] sm:$0xff] %vm490, -inf
        %507 = vst.msk [vmem:[#allocation4] sm:$0xff] %vm490, 0.0
        %508 = vst.msk [vmem:[#allocation4 + $0x8] sm:$0xff] %vm490, 0.0
        %509 = vst.msk [vmem:[#allocation4 + $0x10] sm:$0xff] %vm490, 0.0
        %510 = vst.msk [vmem:[#allocation4 + $0x18] sm:$0xff] %vm490, 0.0
        %511 = vst.msk [vmem:[#allocation4 + $0x20] sm:$0xff] %vm490, 0.0
        %512 = vst.msk [vmem:[#allocation4 + $0x28] sm:$0xff] %vm490, 0.0
        %513 = vst.msk [vmem:[#allocation4 + $0x30] sm:$0xff] %vm490, 0.0
        %514 = vst.msk [vmem:[#allocation4 + $0x38] sm:$0xff] %vm490, 0.0
        %515 = vst.msk [vmem:[#allocation4 + $0x40] sm:$0xff] %vm490, 0.0
        %516 = vst.msk [vmem:[#allocation4 + $0x48] sm:$0xff] %vm490, 0.0
        %517 = vst.msk [vmem:[#allocation4 + $0x50] sm:$0xff] %vm490, 0.0
        %518 = vst.msk [vmem:[#allocation4 + $0x58] sm:$0xff] %vm490, 0.0
        %519 = vst.msk [vmem:[#allocation4 + $0x60] sm:$0xff] %vm490, 0.0
        %520 = vst.msk [vmem:[#allocation4 + $0x68] sm:$0xff] %vm490, 0.0
        %521 = vst.msk [vmem:[#allocation4 + $0x70] sm:$0xff] %vm490, 0.0
        %522 = vst.msk [vmem:[#allocation4 + $0x78] sm:$0xff] %vm490, 0.0
        %523 = vst.msk [vmem:[#allocation5] sm:$0xff] %vm383, 0.0
        %524 = vst.msk [vmem:[#allocation5 + $0x8] sm:$0xff] %vm383, 0.0
        %525 = vst.msk [vmem:[#allocation5 + $0x10] sm:$0xff] %vm383, 0.0
        %526 = vst.msk [vmem:[#allocation5 + $0x18] sm:$0xff] %vm383, 0.0
        %527 = vst.msk [vmem:[#allocation5 + $0x20] sm:$0xff] %vm383, 0.0
        %528 = vst.msk [vmem:[#allocation5 + $0x28] sm:$0xff] %vm383, 0.0
        %529 = vst.msk [vmem:[#allocation5 + $0x30] sm:$0xff] %vm383, 0.0
        %530 = vst.msk [vmem:[#allocation5 + $0x38] sm:$0xff] %vm383, 0.0
        %531 = vst.msk [vmem:[#allocation5 + $0x40] sm:$0xff] %vm383, 0.0
        %532 = vst.msk [vmem:[#allocation5 + $0x48] sm:$0xff] %vm383, 0.0
        %533 = vst.msk [vmem:[#allocation5 + $0x50] sm:$0xff] %vm383, 0.0
        %534 = vst.msk [vmem:[#allocation5 + $0x58] sm:$0xff] %vm383, 0.0
        %535 = vst.msk [vmem:[#allocation5 + $0x60] sm:$0xff] %vm383, 0.0
        %536 = vst.msk [vmem:[#allocation5 + $0x68] sm:$0xff] %vm383, 0.0
        %537 = vst.msk [vmem:[#allocation5 + $0x70] sm:$0xff] %vm383, 0.0
        %538 = vst.msk [vmem:[#allocation5 + $0x78] sm:$0xff] %vm383, 0.0
      $region48: #{tpu_custom_call.1} parent=43 // pred_fallthru
        _
      %v539 = vld [vmem:[%s322] sm:$0xff]
      %v540 = vld [vmem:[%s322 + $0x8] sm:$0xff]
      %v541 = vld [vmem:[%s322 + $0x10] sm:$0xff]
      %v542 = vld [vmem:[%s322 + $0x18] sm:$0xff]
      %v543 = vld [vmem:[%s322 + $0x20] sm:$0xff]
      %v544 = vld [vmem:[%s322 + $0x28] sm:$0xff]
      %v545 = vld [vmem:[%s322 + $0x30] sm:$0xff]
      %v546 = vld [vmem:[%s322 + $0x38] sm:$0xff]
      %v547 = vld [vmem:[%s322 + $0x40] sm:$0xff]
      %v548 = vld [vmem:[%s322 + $0x48] sm:$0xff]
      %v549 = vld [vmem:[%s322 + $0x50] sm:$0xff]
      %v550 = vld [vmem:[%s322 + $0x58] sm:$0xff]
      %v551 = vld [vmem:[%s322 + $0x60] sm:$0xff]
      %v552 = vld [vmem:[%s322 + $0x68] sm:$0xff]
      %v553 = vld [vmem:[%s322 + $0x70] sm:$0xff]
      %v554 = vld [vmem:[%s322 + $0x78] sm:$0xff]
      %v555 = vpack.c.bf16 %v540, %v539
      %v556 = vpack.c.bf16 %v542, %v541
      %v557 = vpack.c.bf16 %v544, %v543
      %v558 = vpack.c.bf16 %v546, %v545
      %v559 = vpack.c.bf16 %v548, %v547
      %v560 = vpack.c.bf16 %v550, %v549
      %v561 = vpack.c.bf16 %v552, %v551
      %v562 = vpack.c.bf16 %v554, %v553
      %v563 = vld [vmem:[%s4] sm:$0xf]
      %v564 = vld [vmem:[%s4 + $0x4] sm:$0xf]
      %v565 = vld [vmem:[%s4 + $0x8] sm:$0xf]
      %v566 = vld [vmem:[%s4 + $0xc] sm:$0xf]
      %v567 = vld [vmem:[%s5] sm:$0x1]
      %v569 = vperm.slane %v567, 0
      %v575 = vunpack.c.l.b16 %v563
      %v576 = vunpack.c.l.b16 %v564
      %v577 = vunpack.c.l.b16 %v565
      %v578 = vunpack.c.l.b16 %v566
      %v579 = vpack.c.b16 %v576, %v575
      %v580 = vpack.c.b16 %v578, %v577
      %vm583 = vcmask 261120
      %v585 = vsel %vm583, %v555, 0
      %v588 = vsel %vm583, %v556, 0
      %v591 = vsel %vm583, %v557, 0
      %v594 = vsel %vm583, %v558, 0
      %v597 = vsel %vm583, %v559, 0
      %v600 = vsel %vm583, %v560, 0
      %v603 = vsel %vm583, %v561, 0
      %v606 = vsel %vm583, %v562, 0
      %608 = vmatpush.bf16.msra.mxu0 0
      %609 = vmatpush.bf16.msra.mxu0 0
      %610 = vmatpush.bf16.msra.mxu0 0
      %611 = vmatpush.bf16.msra.mxu0 0
      %612 = vmatpush.bf16.msra.mxu0 0
      %613 = vmatpush.bf16.msra.mxu0 0
      %614 = vmatpush.bf16.msra.mxu0 %v580
      %615 = vmatpush.bf16.msra.mxu0 %v579
      %616 = vmatmul.bf16.gmra.mxu0 %v585
      %v617 = vpop.f32.mrf.mxu0
      %v618 = vadd.f32 %v569, %v617
      %v619 = vpop.f32.mrf.mxu0
      %v620 = vadd.f32 %v569, %v619
      %621 = vmatmul.bf16.gmra.mxu0 %v588
      %v622 = vpop.f32.mrf.mxu0
      %v623 = vadd.f32 %v569, %v622
      %v624 = vpop.f32.mrf.mxu0
      %v625 = vadd.f32 %v569, %v624
      %626 = vmatmul.bf16.gmra.mxu0 %v591
      %v627 = vpop.f32.mrf.mxu0
      %v628 = vadd.f32 %v569, %v627
      %v629 = vpop.f32.mrf.mxu0
      %v630 = vadd.f32 %v569, %v629
      %631 = vmatmul.bf16.gmra.mxu0 %v594
      %v632 = vpop.f32.mrf.mxu0
      %v633 = vadd.f32 %v569, %v632
      %v634 = vpop.f32.mrf.mxu0
      %v635 = vadd.f32 %v569, %v634
      %636 = vmatmul.bf16.gmra.mxu0 %v597
      %v637 = vpop.f32.mrf.mxu0
      %v638 = vadd.f32 %v569, %v637
      %v639 = vpop.f32.mrf.mxu0
      %v640 = vadd.f32 %v569, %v639
      %641 = vmatmul.bf16.gmra.mxu0 %v600
      %v642 = vpop.f32.mrf.mxu0
      %v643 = vadd.f32 %v569, %v642
      %v644 = vpop.f32.mrf.mxu0
      %v645 = vadd.f32 %v569, %v644
      %646 = vmatmul.bf16.gmra.mxu0 %v603
      %v647 = vpop.f32.mrf.mxu0
      %v648 = vadd.f32 %v569, %v647
      %v649 = vpop.f32.mrf.mxu0
      %v650 = vadd.f32 %v569, %v649
      %651 = vmatmul.bf16.gmra.mxu0 %v606
      %v652 = vpop.f32.mrf.mxu0
      %v653 = vadd.f32 %v569, %v652
      %v654 = vpop.f32.mrf.mxu0
      %v655 = vadd.f32 %v569, %v654
      %656 = vdwg.mxu0
      %v657 = vpack.c.bf16 %v620, %v618
      %v658 = vpack.c.bf16 %v625, %v623
      %v659 = vpack.c.bf16 %v630, %v628
      %v660 = vpack.c.bf16 %v635, %v633
      %v661 = vpack.c.bf16 %v640, %v638
      %v662 = vpack.c.bf16 %v645, %v643
      %v663 = vpack.c.bf16 %v650, %v648
      %v664 = vpack.c.bf16 %v655, %v653
      %v665 = vld [vmem:[#allocation2] sm:$0xf]
      %v666 = vld [vmem:[#allocation2 + $0x4] sm:$0xf]
      %v667 = vld [vmem:[#allocation2 + $0x8] sm:$0xf]
      %v668 = vld [vmem:[#allocation2 + $0xc] sm:$0xf]
      %v669 = vld [vmem:[#allocation2 + $0x10] sm:$0xf]
      %v670 = vld [vmem:[#allocation2 + $0x14] sm:$0xf]
      %v671 = vld [vmem:[#allocation2 + $0x18] sm:$0xf]
      %v672 = vld [vmem:[#allocation2 + $0x1c] sm:$0xf]
      %v673 = vld [vmem:[#allocation2 + $0x20] sm:$0xf]
      %v674 = vld [vmem:[#allocation2 + $0x24] sm:$0xf]
      %v675 = vld [vmem:[#allocation2 + $0x28] sm:$0xf]
      %v676 = vld [vmem:[#allocation2 + $0x2c] sm:$0xf]
      %v677 = vld [vmem:[#allocation2 + $0x30] sm:$0xf]
      %v678 = vld [vmem:[#allocation2 + $0x34] sm:$0xf]
      %v679 = vld [vmem:[#allocation2 + $0x38] sm:$0xf]
      %v680 = vld [vmem:[#allocation2 + $0x3c] sm:$0xf]
      %v697 = vunpack.c.l.b16 %v665
      %v698 = vunpack.c.l.b16 %v666
      %v699 = vunpack.c.l.b16 %v667
      %v700 = vunpack.c.l.b16 %v668
      %v701 = vunpack.c.l.b16 %v669
      %v702 = vunpack.c.l.b16 %v670
      %v703 = vunpack.c.l.b16 %v671
      %v704 = vunpack.c.l.b16 %v672
      %v705 = vunpack.c.l.b16 %v673
      %v706 = vunpack.c.l.b16 %v674
      %v707 = vunpack.c.l.b16 %v675
      %v708 = vunpack.c.l.b16 %v676
      %v709 = vunpack.c.l.b16 %v677
      %v710 = vunpack.c.l.b16 %v678
      %v711 = vunpack.c.l.b16 %v679
      %v712 = vunpack.c.l.b16 %v680
      %v713 = vpack.c.b16 %v698, %v697
      %v714 = vpack.c.b16 %v700, %v699
      %v715 = vpack.c.b16 %v702, %v701
      %v716 = vpack.c.b16 %v704, %v703
      %v717 = vpack.c.b16 %v706, %v705
      %v718 = vpack.c.b16 %v708, %v707
      %v719 = vpack.c.b16 %v710, %v709
      %v720 = vpack.c.b16 %v712, %v711
      %v722 = vsel %vm583, %v713, 0
      %v725 = vsel %vm583, %v714, 0
      %v728 = vsel %vm583, %v715, 0
      %v731 = vsel %vm583, %v716, 0
      %v734 = vsel %vm583, %v717, 0
      %v737 = vsel %vm583, %v718, 0
      %v740 = vsel %vm583, %v719, 0
      %v743 = vsel %vm583, %v720, 0
      %v746 = vsel %vm583, %v657, 0
      %v749 = vsel %vm583, %v658, 0
      %v752 = vsel %vm583, %v659, 0
      %v755 = vsel %vm583, %v660, 0
      %v758 = vsel %vm583, %v661, 0
      %v761 = vsel %vm583, %v662, 0
      %v764 = vsel %vm583, %v663, 0
      %v767 = vsel %vm583, %v664, 0
      %769 = vmatpush.bf16.xpose.msra.mxu0 %v767
      %770 = vmatpush.bf16.xpose.msra.mxu0 %v764
      %771 = vmatpush.bf16.xpose.msra.mxu0 %v761
      %772 = vmatpush.bf16.xpose.msra.mxu0 %v758
      %773 = vmatpush.bf16.xpose.msra.mxu0 %v755
      %774 = vmatpush.bf16.xpose.msra.mxu0 %v752
      %775 = vmatpush.bf16.xpose.msra.mxu0 %v749
      %776 = vmatpush.bf16.xpose.msra.mxu0 %v746
      %777 = vmatmul.bf16.gmra.mxu0 %v722
      %v778 = vpop.f32.mrf.mxu0
      %v779 = vadd.f32 0.0, %v778
      %v780 = vpop.f32.mrf.mxu0
      %v781 = vadd.f32 0.0, %v780
      %782 = vmatmul.bf16.gmra.mxu0 %v725
      %v783 = vpop.f32.mrf.mxu0
      %v784 = vadd.f32 0.0, %v783
      %v785 = vpop.f32.mrf.mxu0
      %v786 = vadd.f32 0.0, %v785
      %787 = vmatmul.bf16.gmra.mxu0 %v728
      %v788 = vpop.f32.mrf.mxu0
      %v789 = vadd.f32 0.0, %v788
      %v790 = vpop.f32.mrf.mxu0
      %v791 = vadd.f32 0.0, %v790
      %792 = vmatmul.bf16.gmra.mxu0 %v731
      %v793 = vpop.f32.mrf.mxu0
      %v794 = vadd.f32 0.0, %v793
      %v795 = vpop.f32.mrf.mxu0
      %v796 = vadd.f32 0.0, %v795
      %797 = vmatmul.bf16.gmra.mxu0 %v734
      %v798 = vpop.f32.mrf.mxu0
      %v799 = vadd.f32 0.0, %v798
      %v800 = vpop.f32.mrf.mxu0
      %v801 = vadd.f32 0.0, %v800
      %802 = vmatmul.bf16.gmra.mxu0 %v737
      %v803 = vpop.f32.mrf.mxu0
      %v804 = vadd.f32 0.0, %v803
      %v805 = vpop.f32.mrf.mxu0
      %v806 = vadd.f32 0.0, %v805
      %807 = vmatmul.bf16.gmra.mxu0 %v740
      %v808 = vpop.f32.mrf.mxu0
      %v809 = vadd.f32 0.0, %v808
      %v810 = vpop.f32.mrf.mxu0
      %v811 = vadd.f32 0.0, %v810
      %812 = vmatmul.bf16.gmra.mxu0 %v743
      %v813 = vpop.f32.mrf.mxu0
      %v814 = vadd.f32 0.0, %v813
      %v815 = vpop.f32.mrf.mxu0
      %v816 = vadd.f32 0.0, %v815
      %817 = vdwg.mxu0
      %v818 = vld [vmem:[#allocation3] sm:$0xff]
      %v819 = vld [vmem:[#allocation3 + $0x8] sm:$0xff]
      %v820 = vld [vmem:[#allocation3 + $0x10] sm:$0xff]
      %v821 = vld [vmem:[#allocation3 + $0x18] sm:$0xff]
      %v822 = vld [vmem:[#allocation3 + $0x20] sm:$0xff]
      %v823 = vld [vmem:[#allocation3 + $0x28] sm:$0xff]
      %v824 = vld [vmem:[#allocation3 + $0x30] sm:$0xff]
      %v825 = vld [vmem:[#allocation3 + $0x38] sm:$0xff]
      %v826 = vld [vmem:[#allocation3 + $0x40] sm:$0xff]
      %v827 = vld [vmem:[#allocation3 + $0x48] sm:$0xff]
      %v828 = vld [vmem:[#allocation3 + $0x50] sm:$0xff]
      %v829 = vld [vmem:[#allocation3 + $0x58] sm:$0xff]
      %v830 = vld [vmem:[#allocation3 + $0x60] sm:$0xff]
      %v831 = vld [vmem:[#allocation3 + $0x68] sm:$0xff]
      %v832 = vld [vmem:[#allocation3 + $0x70] sm:$0xff]
      %v833 = vld [vmem:[#allocation3 + $0x78] sm:$0xff]
      %834 = vmax.xlane.f32.xlu0 %v779
      %v835 = vpop.xlane.xlu0 %834
      %836 = vmax.xlane.f32.xlu0 %v781
      %v837 = vpop.xlane.xlu0 %836
      %838 = vmax.xlane.f32.xlu0 %v784
      %v839 = vpop.xlane.xlu0 %838
      %840 = vmax.xlane.f32.xlu0 %v786
      %v841 = vpop.xlane.xlu0 %840
      %842 = vmax.xlane.f32.xlu0 %v789
      %v843 = vpop.xlane.xlu0 %842
      %844 = vmax.xlane.f32.xlu0 %v791
      %v845 = vpop.xlane.xlu0 %844
      %846 = vmax.xlane.f32.xlu0 %v794
      %v847 = vpop.xlane.xlu0 %846
      %848 = vmax.xlane.f32.xlu0 %v796
      %v849 = vpop.xlane.xlu0 %848
      %850 = vmax.xlane.f32.xlu0 %v799
      %v851 = vpop.xlane.xlu0 %850
      %852 = vmax.xlane.f32.xlu0 %v801
      %v853 = vpop.xlane.xlu0 %852
      %854 = vmax.xlane.f32.xlu0 %v804
      %v855 = vpop.xlane.xlu0 %854
      %856 = vmax.xlane.f32.xlu0 %v806
      %v857 = vpop.xlane.xlu0 %856
      %858 = vmax.xlane.f32.xlu0 %v809
      %v859 = vpop.xlane.xlu0 %858
      %860 = vmax.xlane.f32.xlu0 %v811
      %v861 = vpop.xlane.xlu0 %860
      %862 = vmax.xlane.f32.xlu0 %v814
      %v863 = vpop.xlane.xlu0 %862
      %864 = vmax.xlane.f32.xlu0 %v816
      %v865 = vpop.xlane.xlu0 %864
      %v866 = vmax.f32 %v818, %v835
      %v867 = vmax.f32 %v819, %v837
      %v868 = vmax.f32 %v820, %v839
      %v869 = vmax.f32 %v821, %v841
      %v870 = vmax.f32 %v822, %v843
      %v871 = vmax.f32 %v823, %v845
      %v872 = vmax.f32 %v824, %v847
      %v873 = vmax.f32 %v825, %v849
      %v874 = vmax.f32 %v826, %v851
      %v875 = vmax.f32 %v827, %v853
      %v876 = vmax.f32 %v828, %v855
      %v877 = vmax.f32 %v829, %v857
      %v878 = vmax.f32 %v830, %v859
      %v879 = vmax.f32 %v831, %v861
      %v880 = vmax.f32 %v832, %v863
      %v881 = vmax.f32 %v833, %v865
      %v882 = vsub.f32 %v818, %v866
      %v883 = vsub.f32 %v819, %v867
      %v884 = vsub.f32 %v820, %v868
      %v885 = vsub.f32 %v821, %v869
      %v886 = vsub.f32 %v822, %v870
      %v887 = vsub.f32 %v823, %v871
      %v888 = vsub.f32 %v824, %v872
      %v889 = vsub.f32 %v825, %v873
      %v890 = vsub.f32 %v826, %v874
      %v891 = vsub.f32 %v827, %v875
      %v892 = vsub.f32 %v828, %v876
      %v893 = vsub.f32 %v829, %v877
      %v894 = vsub.f32 %v830, %v878
      %v895 = vsub.f32 %v831, %v879
      %v896 = vsub.f32 %v832, %v880
      %v897 = vsub.f32 %v833, %v881
      %v898 = vmul.f32 %v882, 1.442695
      %v899 = vpow.pop %v898
      %v900 = vmul.f32 %v883, 1.442695
      %v901 = vpow.pop %v900
      %v902 = vmul.f32 %v884, 1.442695
      %v903 = vpow.pop %v902
      %v904 = vmul.f32 %v885, 1.442695
      %v905 = vpow.pop %v904
      %v906 = vmul.f32 %v886, 1.442695
      %v907 = vpow.pop %v906
      %v908 = vmul.f32 %v887, 1.442695
      %v909 = vpow.pop %v908
      %v910 = vmul.f32 %v888, 1.442695
      %v911 = vpow.pop %v910
      %v912 = vmul.f32 %v889, 1.442695
      %v913 = vpow.pop %v912
      %v914 = vmul.f32 %v890, 1.442695
      %v915 = vpow.pop %v914
      %v916 = vmul.f32 %v891, 1.442695
      %v917 = vpow.pop %v916
      %v918 = vmul.f32 %v892, 1.442695
      %v919 = vpow.pop %v918
      %v920 = vmul.f32 %v893, 1.442695
      %v921 = vpow.pop %v920
      %v922 = vmul.f32 %v894, 1.442695
      %v923 = vpow.pop %v922
      %v924 = vmul.f32 %v895, 1.442695
      %v925 = vpow.pop %v924
      %v926 = vmul.f32 %v896, 1.442695
      %v927 = vpow.pop %v926
      %v928 = vmul.f32 %v897, 1.442695
      %v929 = vpow.pop %v928
      %931 = vset.pattern.permute.xlu0 0
      %932 = vperm.xlu0 %931, %v866
      %v933 = vpop.permute.xlu0 %932
      %936 = vset.pattern.permute.xlu0 0
      %937 = vperm.xlu0 %936, %v867
      %v938 = vpop.permute.xlu0 %937
      %941 = vset.pattern.permute.xlu0 0
      %942 = vperm.xlu0 %941, %v868
      %v943 = vpop.permute.xlu0 %942
      %946 = vset.pattern.permute.xlu0 0
      %947 = vperm.xlu0 %946, %v869
      %v948 = vpop.permute.xlu0 %947
      %951 = vset.pattern.permute.xlu0 0
      %952 = vperm.xlu0 %951, %v870
      %v953 = vpop.permute.xlu0 %952
      %956 = vset.pattern.permute.xlu0 0
      %957 = vperm.xlu0 %956, %v871
      %v958 = vpop.permute.xlu0 %957
      %961 = vset.pattern.permute.xlu0 0
      %962 = vperm.xlu0 %961, %v872
      %v963 = vpop.permute.xlu0 %962
      %966 = vset.pattern.permute.xlu0 0
      %967 = vperm.xlu0 %966, %v873
      %v968 = vpop.permute.xlu0 %967
      %971 = vset.pattern.permute.xlu0 0
      %972 = vperm.xlu0 %971, %v874
      %v973 = vpop.permute.xlu0 %972
      %976 = vset.pattern.permute.xlu0 0
      %977 = vperm.xlu0 %976, %v875
      %v978 = vpop.permute.xlu0 %977
      %981 = vset.pattern.permute.xlu0 0
      %982 = vperm.xlu0 %981, %v876
      %v983 = vpop.permute.xlu0 %982
      %986 = vset.pattern.permute.xlu0 0
      %987 = vperm.xlu0 %986, %v877
      %v988 = vpop.permute.xlu0 %987
      %991 = vset.pattern.permute.xlu0 0
      %992 = vperm.xlu0 %991, %v878
      %v993 = vpop.permute.xlu0 %992
      %996 = vset.pattern.permute.xlu0 0
      %997 = vperm.xlu0 %996, %v879
      %v998 = vpop.permute.xlu0 %997
      %1001 = vset.pattern.permute.xlu0 0
      %1002 = vperm.xlu0 %1001, %v880
      %v1003 = vpop.permute.xlu0 %1002
      %1006 = vset.pattern.permute.xlu0 0
      %1007 = vperm.xlu0 %1006, %v881
      %v1008 = vpop.permute.xlu0 %1007
      %v1010 = vsub.f32 %v779, %v933
      %v1011 = vsub.f32 %v781, %v938
      %v1012 = vsub.f32 %v784, %v943
      %v1013 = vsub.f32 %v786, %v948
      %v1014 = vsub.f32 %v789, %v953
      %v1015 = vsub.f32 %v791, %v958
      %v1016 = vsub.f32 %v794, %v963
      %v1017 = vsub.f32 %v796, %v968
      %v1018 = vsub.f32 %v799, %v973
      %v1019 = vsub.f32 %v801, %v978
      %v1020 = vsub.f32 %v804, %v983
      %v1021 = vsub.f32 %v806, %v988
      %v1022 = vsub.f32 %v809, %v993
      %v1023 = vsub.f32 %v811, %v998
      %v1024 = vsub.f32 %v814, %v1003
      %v1025 = vsub.f32 %v816, %v1008
      %v1026 = vmul.f32 %v1010, 1.442695
      %v1027 = vpow.pop %v1026
      %v1028 = vmul.f32 %v1011, 1.442695
      %v1029 = vpow.pop %v1028
      %v1030 = vmul.f32 %v1012, 1.442695
      %v1031 = vpow.pop %v1030
      %v1032 = vmul.f32 %v1013, 1.442695
      %v1033 = vpow.pop %v1032
      %v1034 = vmul.f32 %v1014, 1.442695
      %v1035 = vpow.pop %v1034
      %v1036 = vmul.f32 %v1015, 1.442695
      %v1037 = vpow.pop %v1036
      %v1038 = vmul.f32 %v1016, 1.442695
      %v1039 = vpow.pop %v1038
      %v1040 = vmul.f32 %v1017, 1.442695
      %v1041 = vpow.pop %v1040
      %v1042 = vmul.f32 %v1018, 1.442695
      %v1043 = vpow.pop %v1042
      %v1044 = vmul.f32 %v1019, 1.442695
      %v1045 = vpow.pop %v1044
      %v1046 = vmul.f32 %v1020, 1.442695
      %v1047 = vpow.pop %v1046
      %v1048 = vmul.f32 %v1021, 1.442695
      %v1049 = vpow.pop %v1048
      %v1050 = vmul.f32 %v1022, 1.442695
      %v1051 = vpow.pop %v1050
      %v1052 = vmul.f32 %v1023, 1.442695
      %v1053 = vpow.pop %v1052
      %v1054 = vmul.f32 %v1024, 1.442695
      %v1055 = vpow.pop %v1054
      %v1056 = vmul.f32 %v1025, 1.442695
      %v1057 = vpow.pop %v1056
      %v1058 = vld [vmem:[#allocation4] sm:$0xff]
      %v1059 = vld [vmem:[#allocation4 + $0x8] sm:$0xff]
      %v1060 = vld [vmem:[#allocation4 + $0x10] sm:$0xff]
      %v1061 = vld [vmem:[#allocation4 + $0x18] sm:$0xff]
      %v1062 = vld [vmem:[#allocation4 + $0x20] sm:$0xff]
      %v1063 = vld [vmem:[#allocation4 + $0x28] sm:$0xff]
      %v1064 = vld [vmem:[#allocation4 + $0x30] sm:$0xff]
      %v1065 = vld [vmem:[#allocation4 + $0x38] sm:$0xff]
      %v1066 = vld [vmem:[#allocation4 + $0x40] sm:$0xff]
      %v1067 = vld [vmem:[#allocation4 + $0x48] sm:$0xff]
      %v1068 = vld [vmem:[#allocation4 + $0x50] sm:$0xff]
      %v1069 = vld [vmem:[#allocation4 + $0x58] sm:$0xff]
      %v1070 = vld [vmem:[#allocation4 + $0x60] sm:$0xff]
      %v1071 = vld [vmem:[#allocation4 + $0x68] sm:$0xff]
      %v1072 = vld [vmem:[#allocation4 + $0x70] sm:$0xff]
      %v1073 = vld [vmem:[#allocation4 + $0x78] sm:$0xff]
      %v1074 = vmul.f32 %v899, %v1058
      %v1075 = vmul.f32 %v901, %v1059
      %v1076 = vmul.f32 %v903, %v1060
      %v1077 = vmul.f32 %v905, %v1061
      %v1078 = vmul.f32 %v907, %v1062
      %v1079 = vmul.f32 %v909, %v1063
      %v1080 = vmul.f32 %v911, %v1064
      %v1081 = vmul.f32 %v913, %v1065
      %v1082 = vmul.f32 %v915, %v1066
      %v1083 = vmul.f32 %v917, %v1067
      %v1084 = vmul.f32 %v919, %v1068
      %v1085 = vmul.f32 %v921, %v1069
      %v1086 = vmul.f32 %v923, %v1070
      %v1087 = vmul.f32 %v925, %v1071
      %v1088 = vmul.f32 %v927, %v1072
      %v1089 = vmul.f32 %v929, %v1073
      %1090 = vadd.xlane.f32.xlu0 %v1027
      %v1091 = vpop.xlane.xlu0 %1090
      %1092 = vadd.xlane.f32.xlu0 %v1029
      %v1093 = vpop.xlane.xlu0 %1092
      %1094 = vadd.xlane.f32.xlu0 %v1031
      %v1095 = vpop.xlane.xlu0 %1094
      %1096 = vadd.xlane.f32.xlu0 %v1033
      %v1097 = vpop.xlane.xlu0 %1096
      %1098 = vadd.xlane.f32.xlu0 %v1035
      %v1099 = vpop.xlane.xlu0 %1098
      %1100 = vadd.xlane.f32.xlu0 %v1037
      %v1101 = vpop.xlane.xlu0 %1100
      %1102 = vadd.xlane.f32.xlu0 %v1039
      %v1103 = vpop.xlane.xlu0 %1102
      %1104 = vadd.xlane.f32.xlu0 %v1041
      %v1105 = vpop.xlane.xlu0 %1104
      %1106 = vadd.xlane.f32.xlu0 %v1043
      %v1107 = vpop.xlane.xlu0 %1106
      %1108 = vadd.xlane.f32.xlu0 %v1045
      %v1109 = vpop.xlane.xlu0 %1108
      %1110 = vadd.xlane.f32.xlu0 %v1047
      %v1111 = vpop.xlane.xlu0 %1110
      %1112 = vadd.xlane.f32.xlu0 %v1049
      %v1113 = vpop.xlane.xlu0 %1112
      %1114 = vadd.xlane.f32.xlu0 %v1051
      %v1115 = vpop.xlane.xlu0 %1114
      %1116 = vadd.xlane.f32.xlu0 %v1053
      %v1117 = vpop.xlane.xlu0 %1116
      %1118 = vadd.xlane.f32.xlu0 %v1055
      %v1119 = vpop.xlane.xlu0 %1118
      %1120 = vadd.xlane.f32.xlu0 %v1057
      %v1121 = vpop.xlane.xlu0 %1120
      %v1122 = vadd.f32 %v1074, %v1091
      %v1123 = vadd.f32 %v1075, %v1093
      %v1124 = vadd.f32 %v1076, %v1095
      %v1125 = vadd.f32 %v1077, %v1097
      %v1126 = vadd.f32 %v1078, %v1099
      %v1127 = vadd.f32 %v1079, %v1101
      %v1128 = vadd.f32 %v1080, %v1103
      %v1129 = vadd.f32 %v1081, %v1105
      %v1130 = vadd.f32 %v1082, %v1107
      %v1131 = vadd.f32 %v1083, %v1109
      %v1132 = vadd.f32 %v1084, %v1111
      %v1133 = vadd.f32 %v1085, %v1113
      %v1134 = vadd.f32 %v1086, %v1115
      %v1135 = vadd.f32 %v1087, %v1117
      %v1136 = vadd.f32 %v1088, %v1119
      %v1137 = vadd.f32 %v1089, %v1121
      %vm1138 = vcmask 7168
      %1139 = vst.msk [vmem:[#allocation4] sm:$0xff] %vm1138, %v1122
      %1140 = vst.msk [vmem:[#allocation4 + $0x8] sm:$0xff] %vm1138, %v1123
      %1141 = vst.msk [vmem:[#allocation4 + $0x10] sm:$0xff] %vm1138, %v1124
      %1142 = vst.msk [vmem:[#allocation4 + $0x18] sm:$0xff] %vm1138, %v1125
      %1143 = vst.msk [vmem:[#allocation4 + $0x20] sm:$0xff] %vm1138, %v1126
      %1144 = vst.msk [vmem:[#allocation4 + $0x28] sm:$0xff] %vm1138, %v1127
      %1145 = vst.msk [vmem:[#allocation4 + $0x30] sm:$0xff] %vm1138, %v1128
      %1146 = vst.msk [vmem:[#allocation4 + $0x38] sm:$0xff] %vm1138, %v1129
      %1147 = vst.msk [vmem:[#allocation4 + $0x40] sm:$0xff] %vm1138, %v1130
      %1148 = vst.msk [vmem:[#allocation4 + $0x48] sm:$0xff] %vm1138, %v1131
      %1149 = vst.msk [vmem:[#allocation4 + $0x50] sm:$0xff] %vm1138, %v1132
      %1150 = vst.msk [vmem:[#allocation4 + $0x58] sm:$0xff] %vm1138, %v1133
      %1151 = vst.msk [vmem:[#allocation4 + $0x60] sm:$0xff] %vm1138, %v1134
      %1152 = vst.msk [vmem:[#allocation4 + $0x68] sm:$0xff] %vm1138, %v1135
      %1153 = vst.msk [vmem:[#allocation4 + $0x70] sm:$0xff] %vm1138, %v1136
      %1154 = vst.msk [vmem:[#allocation4 + $0x78] sm:$0xff] %vm1138, %v1137
      %v1155 = vld [vmem:[#allocation5] sm:$0xff]
      %v1156 = vld [vmem:[#allocation5 + $0x8] sm:$0xff]
      %v1157 = vld [vmem:[#allocation5 + $0x10] sm:$0xff]
      %v1158 = vld [vmem:[#allocation5 + $0x18] sm:$0xff]
      %v1159 = vld [vmem:[#allocation5 + $0x20] sm:$0xff]
      %v1160 = vld [vmem:[#allocation5 + $0x28] sm:$0xff]
      %v1161 = vld [vmem:[#allocation5 + $0x30] sm:$0xff]
      %v1162 = vld [vmem:[#allocation5 + $0x38] sm:$0xff]
      %v1163 = vld [vmem:[#allocation5 + $0x40] sm:$0xff]
      %v1164 = vld [vmem:[#allocation5 + $0x48] sm:$0xff]
      %v1165 = vld [vmem:[#allocation5 + $0x50] sm:$0xff]
      %v1166 = vld [vmem:[#allocation5 + $0x58] sm:$0xff]
      %v1167 = vld [vmem:[#allocation5 + $0x60] sm:$0xff]
      %v1168 = vld [vmem:[#allocation5 + $0x68] sm:$0xff]
      %v1169 = vld [vmem:[#allocation5 + $0x70] sm:$0xff]
      %v1170 = vld [vmem:[#allocation5 + $0x78] sm:$0xff]
      %1172 = vset.pattern.permute.xlu0 0
      %1173 = vperm.xlu0 %1172, %v899
      %v1174 = vpop.permute.xlu0 %1173
      %1177 = vset.pattern.permute.xlu0 0
      %1178 = vperm.xlu0 %1177, %v901
      %v1179 = vpop.permute.xlu0 %1178
      %1182 = vset.pattern.permute.xlu0 0
      %1183 = vperm.xlu0 %1182, %v903
      %v1184 = vpop.permute.xlu0 %1183
      %1187 = vset.pattern.permute.xlu0 0
      %1188 = vperm.xlu0 %1187, %v905
      %v1189 = vpop.permute.xlu0 %1188
      %1192 = vset.pattern.permute.xlu0 0
      %1193 = vperm.xlu0 %1192, %v907
      %v1194 = vpop.permute.xlu0 %1193
      %1197 = vset.pattern.permute.xlu0 0
      %1198 = vperm.xlu0 %1197, %v909
      %v1199 = vpop.permute.xlu0 %1198
      %1202 = vset.pattern.permute.xlu0 0
      %1203 = vperm.xlu0 %1202, %v911
      %v1204 = vpop.permute.xlu0 %1203
      %1207 = vset.pattern.permute.xlu0 0
      %1208 = vperm.xlu0 %1207, %v913
      %v1209 = vpop.permute.xlu0 %1208
      %1212 = vset.pattern.permute.xlu0 0
      %1213 = vperm.xlu0 %1212, %v915
      %v1214 = vpop.permute.xlu0 %1213
      %1217 = vset.pattern.permute.xlu0 0
      %1218 = vperm.xlu0 %1217, %v917
      %v1219 = vpop.permute.xlu0 %1218
      %1222 = vset.pattern.permute.xlu0 0
      %1223 = vperm.xlu0 %1222, %v919
      %v1224 = vpop.permute.xlu0 %1223
      %1227 = vset.pattern.permute.xlu0 0
      %1228 = vperm.xlu0 %1227, %v921
      %v1229 = vpop.permute.xlu0 %1228
      %1232 = vset.pattern.permute.xlu0 0
      %1233 = vperm.xlu0 %1232, %v923
      %v1234 = vpop.permute.xlu0 %1233
      %1237 = vset.pattern.permute.xlu0 0
      %1238 = vperm.xlu0 %1237, %v925
      %v1239 = vpop.permute.xlu0 %1238
      %1242 = vset.pattern.permute.xlu0 0
      %1243 = vperm.xlu0 %1242, %v927
      %v1244 = vpop.permute.xlu0 %1243
      %1247 = vset.pattern.permute.xlu0 0
      %1248 = vperm.xlu0 %1247, %v929
      %v1249 = vpop.permute.xlu0 %1248
      %v1251 = vmul.f32 %v1174, %v1155
      %v1252 = vmul.f32 %v1179, %v1156
      %v1253 = vmul.f32 %v1184, %v1157
      %v1254 = vmul.f32 %v1189, %v1158
      %v1255 = vmul.f32 %v1194, %v1159
      %v1256 = vmul.f32 %v1199, %v1160
      %v1257 = vmul.f32 %v1204, %v1161
      %v1258 = vmul.f32 %v1209, %v1162
      %v1259 = vmul.f32 %v1214, %v1163
      %v1260 = vmul.f32 %v1219, %v1164
      %v1261 = vmul.f32 %v1224, %v1165
      %v1262 = vmul.f32 %v1229, %v1166
      %v1263 = vmul.f32 %v1234, %v1167
      %v1264 = vmul.f32 %v1239, %v1168
      %v1265 = vmul.f32 %v1244, %v1169
      %v1266 = vmul.f32 %v1249, %v1170
      %v1267 = vpack.c.bf16 %v1029, %v1027
      %v1268 = vpack.c.bf16 %v1033, %v1031
      %v1269 = vpack.c.bf16 %v1037, %v1035
      %v1270 = vpack.c.bf16 %v1041, %v1039
      %v1271 = vpack.c.bf16 %v1045, %v1043
      %v1272 = vpack.c.bf16 %v1049, %v1047
      %v1273 = vpack.c.bf16 %v1053, %v1051
      %v1274 = vpack.c.bf16 %v1057, %v1055
      %1283 = vrot.lane.b32.xlu0 %v657, 96
      %v1284 = vpop.permute.xlu0 %1283
      %1285 = vrot.lane.b32.xlu0 %v658, 96
      %v1286 = vpop.permute.xlu0 %1285
      %1287 = vrot.lane.b32.xlu0 %v659, 96
      %v1288 = vpop.permute.xlu0 %1287
      %1289 = vrot.lane.b32.xlu0 %v660, 96
      %v1290 = vpop.permute.xlu0 %1289
      %1291 = vrot.lane.b32.xlu0 %v661, 96
      %v1292 = vpop.permute.xlu0 %1291
      %1293 = vrot.lane.b32.xlu0 %v662, 96
      %v1294 = vpop.permute.xlu0 %1293
      %1295 = vrot.lane.b32.xlu0 %v663, 96
      %v1296 = vpop.permute.xlu0 %1295
      %1297 = vrot.lane.b32.xlu0 %v664, 96
      %v1298 = vpop.permute.xlu0 %1297
      %1307 = vmatpush.bf16.msra.mxu0 %v1298
      %1308 = vmatpush.bf16.msra.mxu0 %v1296
      %1309 = vmatpush.bf16.msra.mxu0 %v1294
      %1310 = vmatpush.bf16.msra.mxu0 %v1292
      %1311 = vmatpush.bf16.msra.mxu0 %v1290
      %1312 = vmatpush.bf16.msra.mxu0 %v1288
      %1313 = vmatpush.bf16.msra.mxu0 %v1286
      %1314 = vmatpush.bf16.msra.mxu0 %v1284
      %1315 = vmatmul.bf16.gmra.mxu0 %v1267
      %v1316 = vpop.f32.mrf.mxu0
      %v1317 = vadd.f32 0.0, %v1316
      %v1318 = vpop.f32.mrf.mxu0
      %v1319 = vadd.f32 0.0, %v1318
      %1320 = vmatmul.bf16.gmra.mxu0 %v1268
      %v1321 = vpop.f32.mrf.mxu0
      %v1322 = vadd.f32 0.0, %v1321
      %v1323 = vpop.f32.mrf.mxu0
      %v1324 = vadd.f32 0.0, %v1323
      %1325 = vmatmul.bf16.gmra.mxu0 %v1269
      %v1326 = vpop.f32.mrf.mxu0
      %v1327 = vadd.f32 0.0, %v1326
      %v1328 = vpop.f32.mrf.mxu0
      %v1329 = vadd.f32 0.0, %v1328
      %1330 = vmatmul.bf16.gmra.mxu0 %v1270
      %v1331 = vpop.f32.mrf.mxu0
      %v1332 = vadd.f32 0.0, %v1331
      %v1333 = vpop.f32.mrf.mxu0
      %v1334 = vadd.f32 0.0, %v1333
      %1335 = vmatmul.bf16.gmra.mxu0 %v1271
      %v1336 = vpop.f32.mrf.mxu0
      %v1337 = vadd.f32 0.0, %v1336
      %v1338 = vpop.f32.mrf.mxu0
      %v1339 = vadd.f32 0.0, %v1338
      %1340 = vmatmul.bf16.gmra.mxu0 %v1272
      %v1341 = vpop.f32.mrf.mxu0
      %v1342 = vadd.f32 0.0, %v1341
      %v1343 = vpop.f32.mrf.mxu0
      %v1344 = vadd.f32 0.0, %v1343
      %1345 = vmatmul.bf16.gmra.mxu0 %v1273
      %v1346 = vpop.f32.mrf.mxu0
      %v1347 = vadd.f32 0.0, %v1346
      %v1348 = vpop.f32.mrf.mxu0
      %v1349 = vadd.f32 0.0, %v1348
      %1350 = vmatmul.bf16.gmra.mxu0 %v1274
      %v1351 = vpop.f32.mrf.mxu0
      %v1352 = vadd.f32 0.0, %v1351
      %v1353 = vpop.f32.mrf.mxu0
      %v1354 = vadd.f32 0.0, %v1353
      %1355 = vdwg.mxu0
      %v1356 = vadd.f32 %v1251, %v1317
      %v1357 = vadd.f32 %v1252, %v1319
      %v1358 = vadd.f32 %v1253, %v1322
      %v1359 = vadd.f32 %v1254, %v1324
      %v1360 = vadd.f32 %v1255, %v1327
      %v1361 = vadd.f32 %v1256, %v1329
      %v1362 = vadd.f32 %v1257, %v1332
      %v1363 = vadd.f32 %v1258, %v1334
      %v1364 = vadd.f32 %v1259, %v1337
      %v1365 = vadd.f32 %v1260, %v1339
      %v1366 = vadd.f32 %v1261, %v1342
      %v1367 = vadd.f32 %v1262, %v1344
      %v1368 = vadd.f32 %v1263, %v1347
      %v1369 = vadd.f32 %v1264, %v1349
      %v1370 = vadd.f32 %v1265, %v1352
      %v1371 = vadd.f32 %v1266, %v1354
      %1372 = vst.msk [vmem:[#allocation5] sm:$0xff] %vm583, %v1356
      %1373 = vst.msk [vmem:[#allocation5 + $0x8] sm:$0xff] %vm583, %v1357
      %1374 = vst.msk [vmem:[#allocation5 + $0x10] sm:$0xff] %vm583, %v1358
      %1375 = vst.msk [vmem:[#allocation5 + $0x18] sm:$0xff] %vm583, %v1359
      %1376 = vst.msk [vmem:[#allocation5 + $0x20] sm:$0xff] %vm583, %v1360
      %1377 = vst.msk [vmem:[#allocation5 + $0x28] sm:$0xff] %vm583, %v1361
      %1378 = vst.msk [vmem:[#allocation5 + $0x30] sm:$0xff] %vm583, %v1362
      %1379 = vst.msk [vmem:[#allocation5 + $0x38] sm:$0xff] %vm583, %v1363
      %1380 = vst.msk [vmem:[#allocation5 + $0x40] sm:$0xff] %vm583, %v1364
      %1381 = vst.msk [vmem:[#allocation5 + $0x48] sm:$0xff] %vm583, %v1365
      %1382 = vst.msk [vmem:[#allocation5 + $0x50] sm:$0xff] %vm583, %v1366
      %1383 = vst.msk [vmem:[#allocation5 + $0x58] sm:$0xff] %vm583, %v1367
      %1384 = vst.msk [vmem:[#allocation5 + $0x60] sm:$0xff] %vm583, %v1368
      %1385 = vst.msk [vmem:[#allocation5 + $0x68] sm:$0xff] %vm583, %v1369
      %1386 = vst.msk [vmem:[#allocation5 + $0x70] sm:$0xff] %vm583, %v1370
      %1387 = vst.msk [vmem:[#allocation5 + $0x78] sm:$0xff] %vm583, %v1371
      %1388 = vst.msk [vmem:[#allocation3] sm:$0xff] %vm1138, %v866
      %1389 = vst.msk [vmem:[#allocation3 + $0x8] sm:$0xff] %vm1138, %v867
      %1390 = vst.msk [vmem:[#allocation3 + $0x10] sm:$0xff] %vm1138, %v868
      %1391 = vst.msk [vmem:[#allocation3 + $0x18] sm:$0xff] %vm1138, %v869
      %1392 = vst.msk [vmem:[#allocation3 + $0x20] sm:$0xff] %vm1138, %v870
      %1393 = vst.msk [vmem:[#allocation3 + $0x28] sm:$0xff] %vm1138, %v871
      %1394 = vst.msk [vmem:[#allocation3 + $0x30] sm:$0xff] %vm1138, %v872
      %1395 = vst.msk [vmem:[#allocation3 + $0x38] sm:$0xff] %vm1138, %v873
      %1396 = vst.msk [vmem:[#allocation3 + $0x40] sm:$0xff] %vm1138, %v874
      %1397 = vst.msk [vmem:[#allocation3 + $0x48] sm:$0xff] %vm1138, %v875
      %1398 = vst.msk [vmem:[#allocation3 + $0x50] sm:$0xff] %vm1138, %v876
      %1399 = vst.msk [vmem:[#allocation3 + $0x58] sm:$0xff] %vm1138, %v877
      %1400 = vst.msk [vmem:[#allocation3 + $0x60] sm:$0xff] %vm1138, %v878
      %1401 = vst.msk [vmem:[#allocation3 + $0x68] sm:$0xff] %vm1138, %v879
      %1402 = vst.msk [vmem:[#allocation3 + $0x70] sm:$0xff] %vm1138, %v880
      %1403 = vst.msk [vmem:[#allocation3 + $0x78] sm:$0xff] %vm1138, %v881
      %p1404 = scmp.eq.s32.totalorder %s24, 1
      // Predicated region
      $region49: #{tpu_custom_call.1} parent=43 // pred_check
        %p1405 = pneg %p1404
      $region50: #{tpu_custom_call.1} parent=43 // pred_check_branch
        %1407 = sbr.rel (%p1405) target = $region52
      $region51: #{tpu_custom_call.1} parent=43 // pred_region
        %v1408 = vld [vmem:[#allocation4] sm:$0xff]
        %v1409 = vld [vmem:[#allocation4 + $0x8] sm:$0xff]
        %v1410 = vld [vmem:[#allocation4 + $0x10] sm:$0xff]
        %v1411 = vld [vmem:[#allocation4 + $0x18] sm:$0xff]
        %v1412 = vld [vmem:[#allocation4 + $0x20] sm:$0xff]
        %v1413 = vld [vmem:[#allocation4 + $0x28] sm:$0xff]
        %v1414 = vld [vmem:[#allocation4 + $0x30] sm:$0xff]
        %v1415 = vld [vmem:[#allocation4 + $0x38] sm:$0xff]
        %v1416 = vld [vmem:[#allocation4 + $0x40] sm:$0xff]
        %v1417 = vld [vmem:[#allocation4 + $0x48] sm:$0xff]
        %v1418 = vld [vmem:[#allocation4 + $0x50] sm:$0xff]
        %v1419 = vld [vmem:[#allocation4 + $0x58] sm:$0xff]
        %v1420 = vld [vmem:[#allocation4 + $0x60] sm:$0xff]
        %v1421 = vld [vmem:[#allocation4 + $0x68] sm:$0xff]
        %v1422 = vld [vmem:[#allocation4 + $0x70] sm:$0xff]
        %v1423 = vld [vmem:[#allocation4 + $0x78] sm:$0xff]
        %v1424 = vrcp.pop %v1408
        %v1425 = vrcp.pop %v1409
        %v1426 = vrcp.pop %v1410
        %v1427 = vrcp.pop %v1411
        %v1428 = vrcp.pop %v1412
        %v1429 = vrcp.pop %v1413
        %v1430 = vrcp.pop %v1414
        %v1431 = vrcp.pop %v1415
        %v1432 = vrcp.pop %v1416
        %v1433 = vrcp.pop %v1417
        %v1434 = vrcp.pop %v1418
        %v1435 = vrcp.pop %v1419
        %v1436 = vrcp.pop %v1420
        %v1437 = vrcp.pop %v1421
        %v1438 = vrcp.pop %v1422
        %v1439 = vrcp.pop %v1423
        %v1440 = vld [vmem:[#allocation5] sm:$0xff]
        %v1441 = vld [vmem:[#allocation5 + $0x8] sm:$0xff]
        %v1442 = vld [vmem:[#allocation5 + $0x10] sm:$0xff]
        %v1443 = vld [vmem:[#allocation5 + $0x18] sm:$0xff]
        %v1444 = vld [vmem:[#allocation5 + $0x20] sm:$0xff]
        %v1445 = vld [vmem:[#allocation5 + $0x28] sm:$0xff]
        %v1446 = vld [vmem:[#allocation5 + $0x30] sm:$0xff]
        %v1447 = vld [vmem:[#allocation5 + $0x38] sm:$0xff]
        %v1448 = vld [vmem:[#allocation5 + $0x40] sm:$0xff]
        %v1449 = vld [vmem:[#allocation5 + $0x48] sm:$0xff]
        %v1450 = vld [vmem:[#allocation5 + $0x50] sm:$0xff]
        %v1451 = vld [vmem:[#allocation5 + $0x58] sm:$0xff]
        %v1452 = vld [vmem:[#allocation5 + $0x60] sm:$0xff]
        %v1453 = vld [vmem:[#allocation5 + $0x68] sm:$0xff]
        %v1454 = vld [vmem:[#allocation5 + $0x70] sm:$0xff]
        %v1455 = vld [vmem:[#allocation5 + $0x78] sm:$0xff]
        %1457 = vset.pattern.permute.xlu0 0
        %1458 = vperm.xlu0 %1457, %v1424
        %v1459 = vpop.permute.xlu0 %1458
        %1462 = vset.pattern.permute.xlu0 0
        %1463 = vperm.xlu0 %1462, %v1425
        %v1464 = vpop.permute.xlu0 %1463
        %1467 = vset.pattern.permute.xlu0 0
        %1468 = vperm.xlu0 %1467, %v1426
        %v1469 = vpop.permute.xlu0 %1468
        %1472 = vset.pattern.permute.xlu0 0
        %1473 = vperm.xlu0 %1472, %v1427
        %v1474 = vpop.permute.xlu0 %1473
        %1477 = vset.pattern.permute.xlu0 0
        %1478 = vperm.xlu0 %1477, %v1428
        %v1479 = vpop.permute.xlu0 %1478
        %1482 = vset.pattern.permute.xlu0 0
        %1483 = vperm.xlu0 %1482, %v1429
        %v1484 = vpop.permute.xlu0 %1483
        %1487 = vset.pattern.permute.xlu0 0
        %1488 = vperm.xlu0 %1487, %v1430
        %v1489 = vpop.permute.xlu0 %1488
        %1492 = vset.pattern.permute.xlu0 0
        %1493 = vperm.xlu0 %1492, %v1431
        %v1494 = vpop.permute.xlu0 %1493
        %1497 = vset.pattern.permute.xlu0 0
        %1498 = vperm.xlu0 %1497, %v1432
        %v1499 = vpop.permute.xlu0 %1498
        %1502 = vset.pattern.permute.xlu0 0
        %1503 = vperm.xlu0 %1502, %v1433
        %v1504 = vpop.permute.xlu0 %1503
        %1507 = vset.pattern.permute.xlu0 0
        %1508 = vperm.xlu0 %1507, %v1434
        %v1509 = vpop.permute.xlu0 %1508
        %1512 = vset.pattern.permute.xlu0 0
        %1513 = vperm.xlu0 %1512, %v1435
        %v1514 = vpop.permute.xlu0 %1513
        %1517 = vset.pattern.permute.xlu0 0
        %1518 = vperm.xlu0 %1517, %v1436
        %v1519 = vpop.permute.xlu0 %1518
        %1522 = vset.pattern.permute.xlu0 0
        %1523 = vperm.xlu0 %1522, %v1437
        %v1524 = vpop.permute.xlu0 %1523
        %1527 = vset.pattern.permute.xlu0 0
        %1528 = vperm.xlu0 %1527, %v1438
        %v1529 = vpop.permute.xlu0 %1528
        %1532 = vset.pattern.permute.xlu0 0
        %1533 = vperm.xlu0 %1532, %v1439
        %v1534 = vpop.permute.xlu0 %1533
        %v1536 = vmul.f32 %v1440, %v1459
        %v1537 = vmul.f32 %v1441, %v1464
        %v1538 = vmul.f32 %v1442, %v1469
        %v1539 = vmul.f32 %v1443, %v1474
        %v1540 = vmul.f32 %v1444, %v1479
        %v1541 = vmul.f32 %v1445, %v1484
        %v1542 = vmul.f32 %v1446, %v1489
        %v1543 = vmul.f32 %v1447, %v1494
        %v1544 = vmul.f32 %v1448, %v1499
        %v1545 = vmul.f32 %v1449, %v1504
        %v1546 = vmul.f32 %v1450, %v1509
        %v1547 = vmul.f32 %v1451, %v1514
        %v1548 = vmul.f32 %v1452, %v1519
        %v1549 = vmul.f32 %v1453, %v1524
        %v1550 = vmul.f32 %v1454, %v1529
        %v1551 = vmul.f32 %v1455, %v1534
        %v1552 = vld [vmem:[%s312] sm:$0xff]
        %v1553 = vld [vmem:[%s312 + $0x8] sm:$0xff]
        %v1554 = vld [vmem:[%s312 + $0x10] sm:$0xff]
        %v1555 = vld [vmem:[%s312 + $0x18] sm:$0xff]
        %v1556 = vld [vmem:[%s312 + $0x20] sm:$0xff]
        %v1557 = vld [vmem:[%s312 + $0x28] sm:$0xff]
        %v1558 = vld [vmem:[%s312 + $0x30] sm:$0xff]
        %v1559 = vld [vmem:[%s312 + $0x38] sm:$0xff]
        %v1560 = vld [vmem:[%s312 + $0x40] sm:$0xff]
        %v1561 = vld [vmem:[%s312 + $0x48] sm:$0xff]
        %v1562 = vld [vmem:[%s312 + $0x50] sm:$0xff]
        %v1563 = vld [vmem:[%s312 + $0x58] sm:$0xff]
        %v1564 = vld [vmem:[%s312 + $0x60] sm:$0xff]
        %v1565 = vld [vmem:[%s312 + $0x68] sm:$0xff]
        %v1566 = vld [vmem:[%s312 + $0x70] sm:$0xff]
        %v1567 = vld [vmem:[%s312 + $0x78] sm:$0xff]
        %v1568 = vadd.f32 %v1536, %v1552
        %v1569 = vadd.f32 %v1537, %v1553
        %v1570 = vadd.f32 %v1538, %v1554
        %v1571 = vadd.f32 %v1539, %v1555
        %v1572 = vadd.f32 %v1540, %v1556
        %v1573 = vadd.f32 %v1541, %v1557
        %v1574 = vadd.f32 %v1542, %v1558
        %v1575 = vadd.f32 %v1543, %v1559
        %v1576 = vadd.f32 %v1544, %v1560
        %v1577 = vadd.f32 %v1545, %v1561
        %v1578 = vadd.f32 %v1546, %v1562
        %v1579 = vadd.f32 %v1547, %v1563
        %v1580 = vadd.f32 %v1548, %v1564
        %v1581 = vadd.f32 %v1549, %v1565
        %v1582 = vadd.f32 %v1550, %v1566
        %v1583 = vadd.f32 %v1551, %v1567
        %1584 = vst.msk [vmem:[%s332] sm:$0xff] %vm583, %v1568
        %1585 = vst.msk [vmem:[%s332 + $0x8] sm:$0xff] %vm583, %v1569
        %1586 = vst.msk [vmem:[%s332 + $0x10] sm:$0xff] %vm583, %v1570
        %1587 = vst.msk [vmem:[%s332 + $0x18] sm:$0xff] %vm583, %v1571
        %1588 = vst.msk [vmem:[%s332 + $0x20] sm:$0xff] %vm583, %v1572
        %1589 = vst.msk [vmem:[%s332 + $0x28] sm:$0xff] %vm583, %v1573
        %1590 = vst.msk [vmem:[%s332 + $0x30] sm:$0xff] %vm583, %v1574
        %1591 = vst.msk [vmem:[%s332 + $0x38] sm:$0xff] %vm583, %v1575
        %1592 = vst.msk [vmem:[%s332 + $0x40] sm:$0xff] %vm583, %v1576
        %1593 = vst.msk [vmem:[%s332 + $0x48] sm:$0xff] %vm583, %v1577
        %1594 = vst.msk [vmem:[%s332 + $0x50] sm:$0xff] %vm583, %v1578
        %1595 = vst.msk [vmem:[%s332 + $0x58] sm:$0xff] %vm583, %v1579
        %1596 = vst.msk [vmem:[%s332 + $0x60] sm:$0xff] %vm583, %v1580
        %1597 = vst.msk [vmem:[%s332 + $0x68] sm:$0xff] %vm583, %v1581
        %1598 = vst.msk [vmem:[%s332 + $0x70] sm:$0xff] %vm583, %v1582
        %1599 = vst.msk [vmem:[%s332 + $0x78] sm:$0xff] %vm583, %v1583
      $region52: #{tpu_custom_call.1} parent=43 // pred_fallthru
        _
      %s1600 = smul.u32 16, %s23
      %p1601 = scmp.lt.s32.totalorder %s22, 1
      %s1602 = scalar_select %p1601, %s22, 1
      %p1603 = scmp.lt.s32.totalorder %s1600, 31
      %s1604 = scalar_select %p1603, %s1600, 31
      %s1605 = smul.addr %s1602, 32
      %s1606 = sadd.s32 %s1604, %s1605
      %s1607 = smul.addr %s1606, 8
      %s1608 = scalar_lea.vmem %s6, %s1607
      // Predicated region
      $region53: #{tpu_custom_call.1} parent=43 // pred_check
        %p1609 = pneg %p196
      $region54: #{tpu_custom_call.1} parent=43 // pred_check_branch
        %1611 = sbr.rel (%p1609) target = $region56
      $region55: #{tpu_custom_call.1} parent=43 // pred_region
        %s1612 = smul.u32 16, %s23
      $region56: #{tpu_custom_call.1} parent=43 // pred_fallthru
        _
    $region44: #{tpu_custom_call.1} parent=5 // pred_fallthru
      _
    %p1613 = scmp.le.s32.totalorder 2, %s12
    // Predicated region
    $region57: #{tpu_custom_call.1} parent=5 // pred_check
      %p1614 = pneg %p1613
    $region58: #{tpu_custom_call.1} parent=5 // pred_check_branch
      %1616 = sbr.rel (%p1614) target = $region60
    $region59: #{tpu_custom_call.1} parent=5 // pred_region
      %s1617 = ssub.s32 %s12, 2
      // Predicated region
      $region61: #{tpu_custom_call.1} parent=59 // pred_check
        %p1618 = pneg %p202
      $region62: #{tpu_custom_call.1} parent=59 // pred_check_branch
        %1620 = sbr.rel (%p1618) target = $region64
      $region63: #{tpu_custom_call.1} parent=59 // pred_region
        %s1621 = smul.u32 16, %s26
        %p1622 = scmp.lt.s32.totalorder %s25, 1
        %s1623 = scalar_select %p1622, %s25, 1
        %p1624 = scmp.lt.s32.totalorder %s1621, 31
        %s1625 = scalar_select %p1624, %s1621, 31
        %s1626 = smul.addr %s1623, 32
        %s1627 = sadd.s32 %s1625, %s1626
        %s1628 = smul.addr %s1627, 8
        %s1629 = scalar_lea.vmem %s6, %s1628
      $region64: #{tpu_custom_call.1} parent=59 // pred_fallthru
        _
    $region60: #{tpu_custom_call.1} parent=5 // pred_fallthru
      _
  $region6: #{tpu_custom_call.1} parent=0 // loop_footer
    %s16 = sadd.s32 1, %s12
  $region7: #{tpu_custom_call.1} parent=0 // loop_footer_branch
    %11 = sbr.rel target = $region3
  $region8: #{tpu_custom_call.1} parent=0 // loop_exit
    _

</llo_original>
